<compile_context>
chip_gen: v7x
topology: tpu7x:2x2x1
jax: 0.10.0
libtpu: 0.0.40
codegen_flags: <defaults>
</compile_context>

<pallas_src>
import functools

import jax
import jax.numpy as jnp
import numpy as np
from jax import lax
from jax.experimental import pallas as pl
from jax.experimental.pallas import tpu as pltpu


def _round_up(x, m):
    return (x + m - 1) // m * m


def _choose_tile_oh(N, OH, OW, Cin, Cpad, KH, KW,
                    vmem_budget_bytes=24 * 1024 * 1024):
    """Largest divisor of OH whose double-buffered blocks fit the VMEM budget,
    preferring enough grid steps (>= 4) to keep the pipeline / megacore busy."""
    divisors = [d for d in range(1, OH + 1) if OH % d == 0]

    def fits(th):
        in_b = 2 * (th + KH - 1) * (OW + KW - 1) * Cin * 2   # bf16, double-buffered
        out_b = 2 * th * OW * Cpad * 4                        # f32, double-buffered
        acc_b = th * OW * Cpad * 4                            # epilogue temporaries
        return in_b + out_b + acc_b <= vmem_budget_bytes

    candidates = [d for d in divisors if fits(d)] or [1]
    pipelined = [d for d in candidates if N * (OH // d) >= 4]
    return max(pipelined) if pipelined else max(candidates)


def _basic_conv_kernel(x_ref, w_ref, shift_ref, o_ref,
                       *, KH, KW, TILE_OH, OW, Cin, Cpad, relu):
    # x_ref:     (1, 1, TILE_OH + KH - 1, OW + KW - 1, Cin)  bf16 input row band
    # w_ref:     (KH*KW*Cin, Cpad)                           bf16, BN-scale folded
    # shift_ref: (1, Cpad)                                   f32 folded BN shift
    # o_ref:     (1, TILE_OH, OW, Cpad)                      f32 output tile
    taps = []
    for kh in range(KH):
        for kw in range(KW):
            tap = x_ref[0, 0, kh:kh + TILE_OH, kw:kw + OW, :]   # (TILE_OH, OW, Cin)
            taps.append(tap.reshape(TILE_OH * OW, Cin))
    # im2col LHS: column index = (kh*KW + kw)*Cin + cin, matching the host-side
    # weight reshape (KH, KW, Cin, Cout) -> (KH*KW*Cin, Cout).
    lhs = jnp.concatenate(taps, axis=-1)                        # (M, KH*KW*Cin)

    # Single MXU contraction, f32 accumulate.
    acc = jnp.dot(lhs, w_ref[...], preferred_element_type=jnp.float32)  # (M, Cpad)

    y = acc + shift_ref[0]                                      # f32 epilogue
    if relu:
        y = jnp.maximum(y, 0.0)
    o_ref[...] = y.reshape(1, TILE_OH, OW, Cpad).astype(o_ref.dtype)


def basic_conv(x_nchw, weight_oihw, gamma, beta, running_mean, running_var,
               *, stride=1, padding=0, eps=1e-5, relu=True, bn=True):
    """BasicConv forward: conv(bias=False) -> BN(eval) -> ReLU, NCHW in/out."""
    assert stride == 1, "only stride=1 supported by this kernel"
    N, Cin, H, W = x_nchw.shape
    Cout, Cin_w, KH, KW = weight_oihw.shape
    assert Cin_w == Cin, "groups != 1 not supported"

    OH = H + 2 * padding - KH + 1
    OW = W + 2 * padding - KW + 1
    Cpad = _round_up(Cout, 128)     # lane-dense output / MXU N dimension
    K = KH * KW * Cin

    # ---- glue: BN folding, layout, padding, spatial re-tiling ----
    if bn:
        scale = (gamma / jnp.sqrt(running_var + eps)).astype(jnp.float32)
        shift = (beta - running_mean * scale).astype(jnp.float32)
    else:
        scale = jnp.ones((Cout,), jnp.float32)
        shift = jnp.zeros((Cout,), jnp.float32)

    # HWIO weight with the BN scale folded in, flattened to (K, Cout), padded
    # to (K, Cpad), cast to bf16.
    w = jnp.transpose(weight_oihw.astype(jnp.float32), (2, 3, 1, 0)) * scale
    w = w.reshape(K, Cout)
    w = jnp.pad(w, ((0, 0), (0, Cpad - Cout))).astype(jnp.bfloat16)
    shift_p = jnp.pad(shift, (0, Cpad - Cout)).reshape(1, Cpad)

    # NHWC, zero spatial padding, bf16 operands.
    x = jnp.transpose(x_nchw, (0, 2, 3, 1)).astype(jnp.bfloat16)
    x = jnp.pad(x, ((0, 0), (padding, padding), (padding, padding), (0, 0)))
    Wp = OW + KW - 1   # = W + 2*padding

    TILE_OH = _choose_tile_oh(N, OH, OW, Cin, Cpad, KH, KW)
    T = OH // TILE_OH
    TH = TILE_OH + KH - 1
    # Overlapping row bands (tile rows + halo) so every BlockSpec block is
    # disjoint -> no overlapping-window indexing needed inside the kernel.
    x_tiled = jnp.stack(
        [x[:, t * TILE_OH: t * TILE_OH + TH, :, :] for t in range(T)], axis=1)
    # x_tiled: (N, T, TH, Wp, Cin)

    kernel = functools.partial(
        _basic_conv_kernel, KH=KH, KW=KW, TILE_OH=TILE_OH, OW=OW,
        Cin=Cin, Cpad=Cpad, relu=relu)

    cost = pl.CostEstimate(
        flops=2 * N * OH * OW * K * Cpad,
        transcendentals=0,
        bytes_accessed=(x_tiled.size * 2 + w.size * 2 + shift_p.size * 4
                        + N * OH * OW * Cpad * 4))

    out_nhwc = pl.pallas_call(
        kernel,
        out_shape=jax.ShapeDtypeStruct((N, OH, OW, Cpad), jnp.float32),
        grid_spec=pltpu.PrefetchScalarGridSpec(
            num_scalar_prefetch=0,
            grid=(N, T),
            in_specs=[
                pl.BlockSpec((1, 1, TH, Wp, Cin), lambda n, t: (n, t, 0, 0, 0)),
                # weight / shift have constant index maps -> fetched once and
                # revisited, not re-DMA'd every grid step.
                pl.BlockSpec((K, Cpad), lambda n, t: (0, 0)),
                pl.BlockSpec((1, Cpad), lambda n, t: (0, 0)),
            ],
            out_specs=pl.BlockSpec((1, TILE_OH, OW, Cpad),
                                   lambda n, t: (n, t, 0, 0)),
        ),
        compiler_params=pltpu.CompilerParams(
            dimension_semantics=("parallel", "parallel")),
        cost_estimate=cost,
    )(x_tiled, w, shift_p)

    out_nhwc = out_nhwc[..., :Cout]          # drop the Cout padding
    return jnp.transpose(out_nhwc, (0, 3, 1, 2))  # back to NCHW


def _reference(x_nchw, weight_oihw, gamma, beta, mean, var,
               *, padding, eps=1e-5, relu=True):
    y = lax.conv_general_dilated(
        x_nchw.astype(jnp.float32), weight_oihw.astype(jnp.float32),
        window_strides=(1, 1), padding=[(padding, padding), (padding, padding)],
        dimension_numbers=("NCHW", "OIHW", "NCHW"))
    scale = (gamma / jnp.sqrt(var + eps)).reshape(1, -1, 1, 1)
    shift = (beta - mean * gamma / jnp.sqrt(var + eps)).reshape(1, -1, 1, 1)
    y = y * scale + shift
    if relu:
        y = jnp.maximum(y, 0.0)
    return y


if __name__ == "__main__":
    # BasicConv(in_planes=4, out_planes=8, kernel_size=3, stride=1, padding=1)
    N, Cin, H, W = 2, 4, 16, 16
    Cout, Ksz, pad = 8, 3, 1

    key = jax.random.PRNGKey(0)
    kx, kw, kg, kb, km, kv = jax.random.split(key, 6)

    x = jax.random.normal(kx, (N, Cin, H, W), dtype=jnp.float32)
    # Conv2d weight: (out_planes, in_planes, K, K), bias=False
    weight = jax.random.normal(kw, (Cout, Cin, Ksz, Ksz), dtype=jnp.float32) * 0.1
    # BatchNorm2d params / running stats (deterministic synthetic values)
    gamma = 1.0 + 0.1 * jax.random.normal(kg, (Cout,), dtype=jnp.float32)
    beta = 0.1 * jax.random.normal(kb, (Cout,), dtype=jnp.float32)
    running_mean = 0.1 * jax.random.normal(km, (Cout,), dtype=jnp.float32)
    running_var = jnp.abs(1.0 + 0.1 * jax.random.normal(kv, (Cout,),
                                                        dtype=jnp.float32))

    out = basic_conv(x, weight, gamma, beta, running_mean, running_var,
                     stride=1, padding=pad, relu=True, bn=True)
    out = jax.block_until_ready(out)

    ref = _reference(x, weight, gamma, beta, running_mean, running_var,
                     padding=pad, relu=True)
    # bf16 operands -> looser tolerance than the f32 reference.
    np.testing.assert_allclose(np.asarray(out), np.asarray(ref),
                               rtol=2e-2, atol=2e-2)
    print("KERNEL_OK")
</pallas_src>

<mosaic_0001>
module attributes {stable_mosaic.version = 11 : i64} {
  func.func @_basic_conv_kernel(%arg0: i32, %arg1: i32, %arg2: memref<1x1x10x18x4xbf16, #tpu.memory_space<vmem>>, %arg3: memref<36x128xbf16, #tpu.memory_space<vmem>>, %arg4: memref<1x128xf32, #tpu.memory_space<vmem>>, %arg5: memref<1x8x16x128xf32, #tpu.memory_space<vmem>>) attributes {dimension_semantics = [#tpu.dimension_semantics<parallel>, #tpu.dimension_semantics<parallel>], iteration_bounds = array<i64: 2, 2>, scalar_prefetch = 0 : i64, scratch_operands = 0 : i64, tpu.core_type = #tpu.core_type<tc>, window_params = [{transform_indices = @transform_0, window_bounds = array<i64: 1, 1, 10, 18, 4>}, {pipeline_mode = #tpu.pipeline_mode<synchronous>, transform_indices = @transform_1, window_bounds = array<i64: 36, 128>}, {pipeline_mode = #tpu.pipeline_mode<synchronous>, transform_indices = @transform_2, window_bounds = array<i64: 1, 128>}, {transform_indices = @transform_3, window_bounds = array<i64: 1, 8, 16, 128>}]} {
    %c0 = arith.constant 0 : index
    %c0_0 = arith.constant 0 : index
    %c0_1 = arith.constant 0 : index
    %c0_2 = arith.constant 0 : index
    %c0_3 = arith.constant 0 : index
    %0 = vector.load %arg2[%c0, %c0_0, %c0_1, %c0_2, %c0_3] : memref<1x1x10x18x4xbf16, #tpu.memory_space<vmem>>, vector<1x1x8x16x4xbf16>
    %1 = vector.shape_cast %0 : vector<1x1x8x16x4xbf16> to vector<8x16x4xbf16>
    %2 = vector.shape_cast %1 : vector<8x16x4xbf16> to vector<128x4xbf16>
    %c0_4 = arith.constant 0 : index
    %c0_5 = arith.constant 0 : index
    %c0_6 = arith.constant 0 : index
    %c1 = arith.constant 1 : index
    %c0_7 = arith.constant 0 : index
    %3 = vector.load %arg2[%c0_4, %c0_5, %c0_6, %c1, %c0_7] : memref<1x1x10x18x4xbf16, #tpu.memory_space<vmem>>, vector<1x1x8x16x4xbf16>
    %4 = vector.shape_cast %3 : vector<1x1x8x16x4xbf16> to vector<8x16x4xbf16>
    %5 = vector.shape_cast %4 : vector<8x16x4xbf16> to vector<128x4xbf16>
    %c0_8 = arith.constant 0 : index
    %c0_9 = arith.constant 0 : index
    %c0_10 = arith.constant 0 : index
    %c2 = arith.constant 2 : index
    %c0_11 = arith.constant 0 : index
    %6 = vector.load %arg2[%c0_8, %c0_9, %c0_10, %c2, %c0_11] : memref<1x1x10x18x4xbf16, #tpu.memory_space<vmem>>, vector<1x1x8x16x4xbf16>
    %7 = vector.shape_cast %6 : vector<1x1x8x16x4xbf16> to vector<8x16x4xbf16>
    %8 = vector.shape_cast %7 : vector<8x16x4xbf16> to vector<128x4xbf16>
    %c0_12 = arith.constant 0 : index
    %c0_13 = arith.constant 0 : index
    %c1_14 = arith.constant 1 : index
    %c0_15 = arith.constant 0 : index
    %c0_16 = arith.constant 0 : index
    %9 = vector.load %arg2[%c0_12, %c0_13, %c1_14, %c0_15, %c0_16] : memref<1x1x10x18x4xbf16, #tpu.memory_space<vmem>>, vector<1x1x8x16x4xbf16>
    %10 = vector.shape_cast %9 : vector<1x1x8x16x4xbf16> to vector<8x16x4xbf16>
    %11 = vector.shape_cast %10 : vector<8x16x4xbf16> to vector<128x4xbf16>
    %c0_17 = arith.constant 0 : index
    %c0_18 = arith.constant 0 : index
    %c1_19 = arith.constant 1 : index
    %c1_20 = arith.constant 1 : index
    %c0_21 = arith.constant 0 : index
    %12 = vector.load %arg2[%c0_17, %c0_18, %c1_19, %c1_20, %c0_21] : memref<1x1x10x18x4xbf16, #tpu.memory_space<vmem>>, vector<1x1x8x16x4xbf16>
    %13 = vector.shape_cast %12 : vector<1x1x8x16x4xbf16> to vector<8x16x4xbf16>
    %14 = vector.shape_cast %13 : vector<8x16x4xbf16> to vector<128x4xbf16>
    %c0_22 = arith.constant 0 : index
    %c0_23 = arith.constant 0 : index
    %c1_24 = arith.constant 1 : index
    %c2_25 = arith.constant 2 : index
    %c0_26 = arith.constant 0 : index
    %15 = vector.load %arg2[%c0_22, %c0_23, %c1_24, %c2_25, %c0_26] : memref<1x1x10x18x4xbf16, #tpu.memory_space<vmem>>, vector<1x1x8x16x4xbf16>
    %16 = vector.shape_cast %15 : vector<1x1x8x16x4xbf16> to vector<8x16x4xbf16>
    %17 = vector.shape_cast %16 : vector<8x16x4xbf16> to vector<128x4xbf16>
    %c0_27 = arith.constant 0 : index
    %c0_28 = arith.constant 0 : index
    %c2_29 = arith.constant 2 : index
    %c0_30 = arith.constant 0 : index
    %c0_31 = arith.constant 0 : index
    %18 = vector.load %arg2[%c0_27, %c0_28, %c2_29, %c0_30, %c0_31] : memref<1x1x10x18x4xbf16, #tpu.memory_space<vmem>>, vector<1x1x8x16x4xbf16>
    %19 = vector.shape_cast %18 : vector<1x1x8x16x4xbf16> to vector<8x16x4xbf16>
    %20 = vector.shape_cast %19 : vector<8x16x4xbf16> to vector<128x4xbf16>
    %c0_32 = arith.constant 0 : index
    %c0_33 = arith.constant 0 : index
    %c2_34 = arith.constant 2 : index
    %c1_35 = arith.constant 1 : index
    %c0_36 = arith.constant 0 : index
    %21 = vector.load %arg2[%c0_32, %c0_33, %c2_34, %c1_35, %c0_36] : memref<1x1x10x18x4xbf16, #tpu.memory_space<vmem>>, vector<1x1x8x16x4xbf16>
    %22 = vector.shape_cast %21 : vector<1x1x8x16x4xbf16> to vector<8x16x4xbf16>
    %23 = vector.shape_cast %22 : vector<8x16x4xbf16> to vector<128x4xbf16>
    %c0_37 = arith.constant 0 : index
    %c0_38 = arith.constant 0 : index
    %c2_39 = arith.constant 2 : index
    %c2_40 = arith.constant 2 : index
    %c0_41 = arith.constant 0 : index
    %24 = vector.load %arg2[%c0_37, %c0_38, %c2_39, %c2_40, %c0_41] : memref<1x1x10x18x4xbf16, #tpu.memory_space<vmem>>, vector<1x1x8x16x4xbf16>
    %25 = vector.shape_cast %24 : vector<1x1x8x16x4xbf16> to vector<8x16x4xbf16>
    %26 = vector.shape_cast %25 : vector<8x16x4xbf16> to vector<128x4xbf16>
    %27 = tpu.concatenate %2, %5, %8, %11, %14, %17, %20, %23, %26 in 1 : vector<128x4xbf16>, vector<128x4xbf16>, vector<128x4xbf16>, vector<128x4xbf16>, vector<128x4xbf16>, vector<128x4xbf16>, vector<128x4xbf16>, vector<128x4xbf16>, vector<128x4xbf16> -> vector<128x36xbf16>
    %c0_42 = arith.constant 0 : index
    %c0_43 = arith.constant 0 : index
    %28 = vector.load %arg3[%c0_42, %c0_43] : memref<36x128xbf16, #tpu.memory_space<vmem>>, vector<36x128xbf16>
    %cst = arith.constant dense<0.000000e+00> : vector<128x128xf32>
    %29 = tpu.matmul %27, %28, %cst {dimension_numbers = #tpu.dot_dimension_numbers<[1], [0], [0], [1], [0, 0, 1, 1], [], []>} : vector<128x36xbf16>, vector<36x128xbf16>, vector<128x128xf32> -> vector<128x128xf32>
    %c0_44 = arith.constant 0 : index
    %c0_45 = arith.constant 0 : index
    %30 = vector.load %arg4[%c0_44, %c0_45] : memref<1x128xf32, #tpu.memory_space<vmem>>, vector<1x128xf32>
    %31 = vector.shape_cast %30 : vector<1x128xf32> to vector<128xf32>
    %32 = vector.shape_cast %31 : vector<128xf32> to vector<1x128xf32>
    %33 = vector.broadcast %32 : vector<1x128xf32> to vector<128x128xf32>
    %34 = arith.addf %29, %33 : vector<128x128xf32>
    %cst_46 = arith.constant 0.000000e+00 : f32
    %35 = vector.broadcast %cst_46 : f32 to vector<128x128xf32>
    %36 = arith.maximumf %34, %35 : vector<128x128xf32>
    %37 = vector.shape_cast %36 : vector<128x128xf32> to vector<1x8x16x128xf32>
    %c0_47 = arith.constant 0 : index
    %c0_48 = arith.constant 0 : index
    %c0_49 = arith.constant 0 : index
    %c0_50 = arith.constant 0 : index
    %38 = vector.load %arg5[%c0_47, %c0_48, %c0_49, %c0_50] : memref<1x8x16x128xf32, #tpu.memory_space<vmem>>, vector<1x8x16x128xf32>
    tpu.vector_store %arg5[%c0_47, %c0_48, %c0_49, %c0_50], %37 {strides = array<i32>} : memref<1x8x16x128xf32, #tpu.memory_space<vmem>>, vector<1x8x16x128xf32>,
    return
  }
  func.func @transform_0(%arg0: i32, %arg1: i32) -> (i32, i32, i32, i32, i32) {
    %c0_i32 = arith.constant 0 : i32
    %c0_i32_0 = arith.constant 0 : i32
    %c0_i32_1 = arith.constant 0 : i32
    %c0_i32_2 = arith.constant 0 : i32
    return %arg0, %arg1, %c0_i32, %c0_i32_0, %c0_i32_1 : i32, i32, i32, i32, i32
  }
  func.func @transform_1(%arg0: i32, %arg1: i32) -> (i32, i32) {
    %c0_i32 = arith.constant 0 : i32
    %c0_i32_0 = arith.constant 0 : i32
    %c0_i32_1 = arith.constant 0 : i32
    return %c0_i32, %c0_i32_0 : i32, i32
  }
  func.func @transform_2(%arg0: i32, %arg1: i32) -> (i32, i32) {
    %c0_i32 = arith.constant 0 : i32
    %c0_i32_0 = arith.constant 0 : i32
    %c0_i32_1 = arith.constant 0 : i32
    return %c0_i32, %c0_i32_0 : i32, i32
  }
  func.func @transform_3(%arg0: i32, %arg1: i32) -> (i32, i32, i32, i32) {
    %c0_i32 = arith.constant 0 : i32
    %c0_i32_0 = arith.constant 0 : i32
    %c0_i32_1 = arith.constant 0 : i32
    return %arg0, %arg1, %c0_i32, %c0_i32_0 : i32, i32, i32, i32
  }
}

</mosaic_0001>

<llo_original>
// kernel: tpu_custom_call.1
$region0: #{tpu_custom_call.1}
  #allocation0 [shape = 'u32[]', space=smem, size = 0x4, offset = 0x4, fixed_abs, tag = 'smem constant byte address 0x4 - core index']
  #allocation1 [shape = 'u32[144,128]{1,0:T(1,128)}', space=vmem, size = 0x12000, scoped, tag = 'internal scratch']
  %s0 = inlined_call_operand.vmem [shape: bf16[2,2,10,18,4], index: 0, kind: input, shape index: {}]
  %s1 = inlined_call_operand.vmem [shape: bf16[36,128], index: 1, kind: input, shape index: {}]
  %s2 = inlined_call_operand.vmem [shape: f32[1,128], index: 2, kind: input, shape index: {}]
  %s3 = inlined_call_operand.hbm [shape: f32[2,16,16,128], index: 3, kind: output, shape index: {}]
  %s4 = sld [smem:[#allocation0]]
  $region45: #{tpu_custom_call.1} parent=0
    _
  %s6 = ssub.s32 1, %s4
  %s7 = scalar_select 0, %s6, %s4
  $region1: #{tpu_custom_call.1} parent=0
    #allocation2 [shape = 'u8[131072]{0}', space=vmem, size = 0x20000, scoped, tag = 'output window, operand 0']
    #allocation3 [shape = 's32[2]{0}', space=sflag, size = 0x8, scoped, tag = 'scoped memory for tpu_custom_call.1']
    %8 = vsyncpa [#allocation3], 0
    %s9 = scalar_lea.sflag [#allocation3], 1
    %10 = vsyncpa %s9, 0
    loop: start=0, step=1, limit=6
    $region2: #{tpu_custom_call.1} parent=1 // loop_pre_header
      _
    $region3: #{tpu_custom_call.1} parent=1 // loop_header
      %s12 = sphi 0, %s16
      %p13 = scmp.ge.s32.totalorder %s12, 6
      %s19 = sphi 0, %s31
      %s20 = sphi 0, %s27
      %s21 = sphi 0, %s19
      %s22 = sphi 0, %s20
      %s23 = sphi 0, %s21
      %s24 = sphi 0, %s22
      %s36 = sphi 0, %s38
      %s39 = sphi 0, %s36
      %s40 = sphi 0, %s39
      %s56 = sphi 0, %s40
      %s60 = sphi 0, %s60
      %s62 = sphi 0, %s60
      %s63 = sphi 0, %s62
      %s77 = sphi 0, %s63
      %s81 = sphi 0, %s81
      %s83 = sphi 0, %s81
      %s84 = sphi 0, %s83
      %s98 = sphi 0, %s84
      %s106 = sphi 0, %s108
      %s109 = sphi 0, %s106
      %s110 = sphi 0, %s109
      %s126 = sphi 0, %s110
    $region4: #{tpu_custom_call.1} parent=1 // loop_header_branch
      %15 = sbr.rel (%p13) target = $region8
    $region5: #{tpu_custom_call.1} parent=1 // loop_body
      %s17 = ssub.s32 %s12, 1
      %s18 = ssub.s32 %s12, 2
      %s25 = sadd.s32 1, %s20
      %p26 = scmp.ge.s32.totalorder %s25, 2
      %s27 = scalar_select %p26, 0, %s25
      %s28 = sadd.s32 1, %s19
      %s29 = scalar_select %p26, %s28, %s19
      %p30 = scmp.ge.s32.totalorder %s29, 2
      %s31 = scalar_select %p30, 0, %s29
      %s32 = ssub.s32 %s19, %s31
      %s33 = ssub.s32 %s20, %s27
      %s34 = sor.u32 %s32, %s33
      %p35 = scmp.eq.s32.totalorder %s34, 0
      %s37 = sadd.s32 %s36, 1
      %s38 = scalar_select %p35, %s36, %s37
      %p41 = pneg %p35
      %p42 = scmp.eq.s32.totalorder %s12, 3
      %p43 = por %p41, %p42
      %p44 = scmp.ne.s32.totalorder %s36, %s39
      %p45 = scmp.eq.s32.totalorder %s12, 0
      %p46 = por %p44, %p45
      %p47 = scmp.ne.s32.totalorder %s36, %s39
      %p48 = scmp.eq.s32.totalorder %s17, 3
      %p49 = por %p47, %p48
      %p50 = scmp.ne.s32.totalorder %s39, %s40
      %p51 = scmp.eq.s32.totalorder %s17, 0
      %p52 = por %p50, %p51
      %p53 = scmp.ne.s32.totalorder %s39, %s40
      %p54 = scmp.eq.s32.totalorder %s18, 3
      %p55 = por %p53, %p54
      %p57 = scmp.ne.s32.totalorder %s40, %s56
      %p58 = scmp.eq.s32.totalorder %s18, 0
      %p59 = por %p57, %p58
      %s61 = sadd.s32 %s60, 1
      %p64 = scmp.eq.s32.totalorder %s12, 3
      %p65 = scmp.ne.s32.totalorder %s60, %s62
      %p66 = scmp.eq.s32.totalorder %s12, 0
      %p67 = por %p65, %p66
      %p68 = scmp.ne.s32.totalorder %s60, %s62
      %p69 = scmp.eq.s32.totalorder %s17, 3
      %p70 = por %p68, %p69
      %p71 = scmp.ne.s32.totalorder %s62, %s63
      %p72 = scmp.eq.s32.totalorder %s17, 0
      %p73 = por %p71, %p72
      %p74 = scmp.ne.s32.totalorder %s62, %s63
      %p75 = scmp.eq.s32.totalorder %s18, 3
      %p76 = por %p74, %p75
      %p78 = scmp.ne.s32.totalorder %s63, %s77
      %p79 = scmp.eq.s32.totalorder %s18, 0
      %p80 = por %p78, %p79
      %s82 = sadd.s32 %s81, 1
      %p85 = scmp.eq.s32.totalorder %s12, 3
      %p86 = scmp.ne.s32.totalorder %s81, %s83
      %p87 = scmp.eq.s32.totalorder %s12, 0
      %p88 = por %p86, %p87
      %p89 = scmp.ne.s32.totalorder %s81, %s83
      %p90 = scmp.eq.s32.totalorder %s17, 3
      %p91 = por %p89, %p90
      %p92 = scmp.ne.s32.totalorder %s83, %s84
      %p93 = scmp.eq.s32.totalorder %s17, 0
      %p94 = por %p92, %p93
      %p95 = scmp.ne.s32.totalorder %s83, %s84
      %p96 = scmp.eq.s32.totalorder %s18, 3
      %p97 = por %p95, %p96
      %p99 = scmp.ne.s32.totalorder %s84, %s98
      %p100 = scmp.eq.s32.totalorder %s18, 0
      %p101 = por %p99, %p100
      %s102 = ssub.s32 %s19, %s31
      %s103 = ssub.s32 %s20, %s27
      %s104 = sor.u32 %s102, %s103
      %p105 = scmp.eq.s32.totalorder %s104, 0
      %s107 = sadd.s32 %s106, 1
      %s108 = scalar_select %p105, %s106, %s107
      %p111 = pneg %p105
      %p112 = scmp.eq.s32.totalorder %s12, 3
      %p113 = por %p111, %p112
      %p114 = scmp.ne.s32.totalorder %s106, %s109
      %p115 = scmp.eq.s32.totalorder %s12, 0
      %p116 = por %p114, %p115
      %p117 = scmp.ne.s32.totalorder %s106, %s109
      %p118 = scmp.eq.s32.totalorder %s17, 3
      %p119 = por %p117, %p118
      %p120 = scmp.ne.s32.totalorder %s109, %s110
      %p121 = scmp.eq.s32.totalorder %s17, 0
      %p122 = por %p120, %p121
      %p123 = scmp.ne.s32.totalorder %s109, %s110
      %p124 = scmp.eq.s32.totalorder %s18, 3
      %p125 = por %p123, %p124
      %p127 = scmp.ne.s32.totalorder %s110, %s126
      %p128 = scmp.eq.s32.totalorder %s18, 0
      %p129 = por %p127, %p128
      %p130 = scmp.le.s32.totalorder 1, %s12
      %p131 = scmp.lt.s32.totalorder %s12, 5
      %p132 = pnand %p130, %p131
      %p133 = pneg %p132
      // Predicated region
      $region9: #{tpu_custom_call.1} parent=5 // pred_check
        _
      $region10: #{tpu_custom_call.1} parent=5 // pred_check_branch
        %135 = sbr.rel (%p132) target = $region12
      $region11: #{tpu_custom_call.1} parent=5 // pred_region
        %s136 = ssub.s32 %s12, 1
        // Predicated region
        $region13: #{tpu_custom_call.1} parent=11 // pred_check
          %p137 = pneg %p73
        $region14: #{tpu_custom_call.1} parent=11 // pred_check_branch
          %139 = sbr.rel (%p137) target = $region16
        $region15: #{tpu_custom_call.1} parent=11 // pred_region
          _
        $region16: #{tpu_custom_call.1} parent=11 // pred_fallthru
          _
        // Predicated region
        $region17: #{tpu_custom_call.1} parent=11 // pred_check
          %p140 = pneg %p94
        $region18: #{tpu_custom_call.1} parent=11 // pred_check_branch
          %142 = sbr.rel (%p140) target = $region20
        $region19: #{tpu_custom_call.1} parent=11 // pred_region
          _
        $region20: #{tpu_custom_call.1} parent=11 // pred_fallthru
          _
      $region12: #{tpu_custom_call.1} parent=5 // pred_fallthru
        _
      %p143 = scmp.lt.s32.totalorder %s12, 4
      // Predicated region
      $region21: #{tpu_custom_call.1} parent=5 // pred_check
        %p144 = pneg %p143
      $region22: #{tpu_custom_call.1} parent=5 // pred_check_branch
        %146 = sbr.rel (%p144) target = $region24
      $region23: #{tpu_custom_call.1} parent=5 // pred_region
        // Predicated region
        $region25: #{tpu_custom_call.1} parent=23 // pred_check
          %p147 = pneg %p46
        $region26: #{tpu_custom_call.1} parent=23 // pred_check_branch
          %149 = sbr.rel (%p147) target = $region28
        $region27: #{tpu_custom_call.1} parent=23 // pred_region
          %p150 = scmp.lt.s32.totalorder %s19, 1
          %s151 = scalar_select %p150, %s19, 1
          %p152 = scmp.lt.s32.totalorder %s20, 1
          %s153 = scalar_select %p152, %s20, 1
          %s154 = smul.addr %s153, 30
          %s155 = smul.addr %s151, 60
          %s156 = sadd.s32 %s154, %s155
          %s157 = smul.addr %s156, 4
          %s158 = scalar_lea.vmem %s0, %s157
        $region28: #{tpu_custom_call.1} parent=23 // pred_fallthru
          _
      $region24: #{tpu_custom_call.1} parent=5 // pred_fallthru
        _
      %p159 = scmp.le.s32.totalorder 1, %s12
      %p160 = scmp.lt.s32.totalorder %s12, 5
      %p161 = pnand %p159, %p160
      %p162 = pneg %p161
      // Predicated region
      $region29: #{tpu_custom_call.1} parent=5 // pred_check
        _
      $region30: #{tpu_custom_call.1} parent=5 // pred_check_branch
        %164 = sbr.rel (%p161) target = $region32
      $region31: #{tpu_custom_call.1} parent=5 // pred_region
        %s165 = ssub.s32 %s12, 1
        %p166 = scmp.lt.s32.totalorder %s21, 1
        %s167 = scalar_select %p166, %s21, 1
        %p168 = scmp.lt.s32.totalorder %s22, 1
        %s169 = scalar_select %p168, %s22, 1
        %s170 = smul.addr %s169, 30
        %s171 = smul.addr %s167, 60
        %s172 = sadd.s32 %s170, %s171
        %s173 = smul.addr %s172, 4
        %s174 = scalar_lea.vmem %s0, %s173
        %p175 = pneg %p52
        %p176 = pneg %p49
        %p177 = pneg %p73
        %p178 = pneg %p70
        %p179 = pneg %p94
        %p180 = pneg %p91
        %p181 = pneg %p122
        %p182 = pneg %p119
        %s183 = sand.u32 %s109, 1
        %s184 = scalar_lea.sflag [#allocation3], %s183
        %s185 = sand.u32 %s109, 1
        %s186 = smul.addr %s185, 128
        %s187 = scalar_lea.vmem [#allocation2], %s186
        %p188 = scmp.lt.s32.totalorder %s21, 1
        %s189 = scalar_select %p188, %s21, 1
        %p190 = scmp.lt.s32.totalorder %s22, 1
        %s191 = scalar_select %p190, %s22, 1
        %s192 = smul.addr %s191, 30
        %s193 = smul.addr %s189, 60
        %s194 = sadd.s32 %s192, %s193
        %s195 = smul.addr %s194, 4
        %s196 = scalar_lea.vmem %s0, %s195
        %s197 = smul.u32 8, %s22
        %v199 = vld [vmem:[%s196] sm:$0xf]
        %v200 = vld [vmem:[%s196 + $0x4] sm:$0xf]
        %v201 = vld [vmem:[%s196 + $0xc] sm:$0xf]
        %v202 = vld [vmem:[%s196 + $0x10] sm:$0xf]
        %v203 = vld [vmem:[%s196 + $0x18] sm:$0xf]
        %v204 = vld [vmem:[%s196 + $0x1c] sm:$0xf]
        %v205 = vld [vmem:[%s196 + $0x24] sm:$0xf]
        %v206 = vld [vmem:[%s196 + $0x28] sm:$0xf]
        %v207 = vld [vmem:[%s196 + $0x30] sm:$0xf]
        %v208 = vld [vmem:[%s196 + $0x34] sm:$0xf]
        %v209 = vld [vmem:[%s196 + $0x3c] sm:$0xf]
        %v210 = vld [vmem:[%s196 + $0x40] sm:$0xf]
        %v211 = vld [vmem:[%s196 + $0x48] sm:$0xf]
        %v212 = vld [vmem:[%s196 + $0x4c] sm:$0xf]
        %v213 = vld [vmem:[%s196 + $0x54] sm:$0xf]
        %v214 = vld [vmem:[%s196 + $0x58] sm:$0xf]
        %v215 = vld [vmem:[%s196 + $0x8] sm:$0x1]
        %v216 = vld [vmem:[%s196 + $0x14] sm:$0x1]
        %v217 = vld [vmem:[%s196 + $0x20] sm:$0x1]
        %v218 = vld [vmem:[%s196 + $0x2c] sm:$0x1]
        %v219 = vld [vmem:[%s196 + $0x38] sm:$0x1]
        %v220 = vld [vmem:[%s196 + $0x44] sm:$0x1]
        %v221 = vld [vmem:[%s196 + $0x50] sm:$0x1]
        %v222 = vld [vmem:[%s196 + $0x5c] sm:$0x1]
        %vm223 = vsmask.f32 3328
        %vm224 = vsmask.f32 7440
        %vm225 = vmor %vm223, %vm224
        %v227 = vshrl.u32 %v199, 16
        %v229 = vrot.slane %v227, 4
        %v230 = vshll.u32 %v199, 16
        %v232 = vrot.slane %v230, 5
        %v233 = vor.u32 %v229, %v232
        %v234 = vrot.slane %v233, 4
        %v236 = vshll.u32 %v200, 16
        %v238 = vrot.slane %v236, 5
        %v239 = vsel %vm225, %v234, %v238
        %v240 = vshrl.u32 %v200, 16
        %v242 = vrot.slane %v240, 4
        %v243 = vor.u32 %v242, %v238
        %v244 = vrot.slane %v243, 4
        %v246 = vshll.u32 %v215, 16
        %v248 = vrot.slane %v246, 5
        %v249 = vsel %vm225, %v244, %v248
        %v251 = vshrl.u32 %v201, 16
        %v253 = vrot.slane %v251, 4
        %v254 = vshll.u32 %v201, 16
        %v256 = vrot.slane %v254, 5
        %v257 = vor.u32 %v253, %v256
        %v258 = vrot.slane %v257, 4
        %v260 = vshll.u32 %v202, 16
        %v262 = vrot.slane %v260, 5
        %v263 = vsel %vm225, %v258, %v262
        %v264 = vshrl.u32 %v202, 16
        %v266 = vrot.slane %v264, 4
        %v267 = vor.u32 %v266, %v262
        %v268 = vrot.slane %v267, 4
        %v270 = vshll.u32 %v216, 16
        %v272 = vrot.slane %v270, 5
        %v273 = vsel %vm225, %v268, %v272
        %v275 = vshrl.u32 %v203, 16
        %v277 = vrot.slane %v275, 4
        %v278 = vshll.u32 %v203, 16
        %v280 = vrot.slane %v278, 5
        %v281 = vor.u32 %v277, %v280
        %v282 = vrot.slane %v281, 4
        %v284 = vshll.u32 %v204, 16
        %v286 = vrot.slane %v284, 5
        %v287 = vsel %vm225, %v282, %v286
        %v288 = vshrl.u32 %v204, 16
        %v290 = vrot.slane %v288, 4
        %v291 = vor.u32 %v290, %v286
        %v292 = vrot.slane %v291, 4
        %v294 = vshll.u32 %v217, 16
        %v296 = vrot.slane %v294, 5
        %v297 = vsel %vm225, %v292, %v296
        %v299 = vshrl.u32 %v205, 16
        %v301 = vrot.slane %v299, 4
        %v302 = vshll.u32 %v205, 16
        %v304 = vrot.slane %v302, 5
        %v305 = vor.u32 %v301, %v304
        %v306 = vrot.slane %v305, 4
        %v308 = vshll.u32 %v206, 16
        %v310 = vrot.slane %v308, 5
        %v311 = vsel %vm225, %v306, %v310
        %v312 = vshrl.u32 %v206, 16
        %v314 = vrot.slane %v312, 4
        %v315 = vor.u32 %v314, %v310
        %v316 = vrot.slane %v315, 4
        %v318 = vshll.u32 %v218, 16
        %v320 = vrot.slane %v318, 5
        %v321 = vsel %vm225, %v316, %v320
        %v323 = vshrl.u32 %v207, 16
        %v325 = vrot.slane %v323, 4
        %v326 = vshll.u32 %v207, 16
        %v328 = vrot.slane %v326, 5
        %v329 = vor.u32 %v325, %v328
        %v330 = vrot.slane %v329, 4
        %v332 = vshll.u32 %v208, 16
        %v334 = vrot.slane %v332, 5
        %v335 = vsel %vm225, %v330, %v334
        %v336 = vshrl.u32 %v208, 16
        %v338 = vrot.slane %v336, 4
        %v339 = vor.u32 %v338, %v334
        %v340 = vrot.slane %v339, 4
        %v342 = vshll.u32 %v219, 16
        %v344 = vrot.slane %v342, 5
        %v345 = vsel %vm225, %v340, %v344
        %v347 = vshrl.u32 %v209, 16
        %v349 = vrot.slane %v347, 4
        %v350 = vshll.u32 %v209, 16
        %v352 = vrot.slane %v350, 5
        %v353 = vor.u32 %v349, %v352
        %v354 = vrot.slane %v353, 4
        %v356 = vshll.u32 %v210, 16
        %v358 = vrot.slane %v356, 5
        %v359 = vsel %vm225, %v354, %v358
        %v360 = vshrl.u32 %v210, 16
        %v362 = vrot.slane %v360, 4
        %v363 = vor.u32 %v362, %v358
        %v364 = vrot.slane %v363, 4
        %v366 = vshll.u32 %v220, 16
        %v368 = vrot.slane %v366, 5
        %v369 = vsel %vm225, %v364, %v368
        %v371 = vshrl.u32 %v211, 16
        %v373 = vrot.slane %v371, 4
        %v374 = vshll.u32 %v211, 16
        %v376 = vrot.slane %v374, 5
        %v377 = vor.u32 %v373, %v376
        %v378 = vrot.slane %v377, 4
        %v380 = vshll.u32 %v212, 16
        %v382 = vrot.slane %v380, 5
        %v383 = vsel %vm225, %v378, %v382
        %v384 = vshrl.u32 %v212, 16
        %v386 = vrot.slane %v384, 4
        %v387 = vor.u32 %v386, %v382
        %v388 = vrot.slane %v387, 4
        %v390 = vshll.u32 %v221, 16
        %v392 = vrot.slane %v390, 5
        %v393 = vsel %vm225, %v388, %v392
        %v395 = vshrl.u32 %v213, 16
        %v397 = vrot.slane %v395, 4
        %v398 = vshll.u32 %v213, 16
        %v400 = vrot.slane %v398, 5
        %v401 = vor.u32 %v397, %v400
        %v402 = vrot.slane %v401, 4
        %v404 = vshll.u32 %v214, 16
        %v406 = vrot.slane %v404, 5
        %v407 = vsel %vm225, %v402, %v406
        %v408 = vshrl.u32 %v214, 16
        %v410 = vrot.slane %v408, 4
        %v411 = vor.u32 %v410, %v406
        %v412 = vrot.slane %v411, 4
        %v414 = vshll.u32 %v222, 16
        %v416 = vrot.slane %v414, 5
        %v417 = vsel %vm225, %v412, %v416
        %v418 = vld [vmem:[%s196] sm:$0xe]
        %v419 = vld [vmem:[%s196 + $0xc] sm:$0xe]
        %v420 = vld [vmem:[%s196 + $0x18] sm:$0xe]
        %v421 = vld [vmem:[%s196 + $0x24] sm:$0xe]
        %v422 = vld [vmem:[%s196 + $0x30] sm:$0xe]
        %v423 = vld [vmem:[%s196 + $0x3c] sm:$0xe]
        %v424 = vld [vmem:[%s196 + $0x48] sm:$0xe]
        %v425 = vld [vmem:[%s196 + $0x54] sm:$0xe]
        %vm450 = vcmask 1042432
        %vm451 = vcmask 1046532
        %vm452 = vmor %vm450, %vm451
        %v453 = vrot.slane %v418, 5
        %v454 = vrot.slane %v453, 4
        %v455 = vrot.slane %v200, 5
        %v456 = vsel %vm452, %v454, %v455
        %v457 = vrot.slane %v455, 4
        %v458 = vrot.slane %v215, 5
        %v459 = vsel %vm452, %v457, %v458
        %v460 = vrot.slane %v419, 5
        %v461 = vrot.slane %v460, 4
        %v462 = vrot.slane %v202, 5
        %v463 = vsel %vm452, %v461, %v462
        %v464 = vrot.slane %v462, 4
        %v465 = vrot.slane %v216, 5
        %v466 = vsel %vm452, %v464, %v465
        %v467 = vrot.slane %v420, 5
        %v468 = vrot.slane %v467, 4
        %v469 = vrot.slane %v204, 5
        %v470 = vsel %vm452, %v468, %v469
        %v471 = vrot.slane %v469, 4
        %v472 = vrot.slane %v217, 5
        %v473 = vsel %vm452, %v471, %v472
        %v474 = vrot.slane %v421, 5
        %v475 = vrot.slane %v474, 4
        %v476 = vrot.slane %v206, 5
        %v477 = vsel %vm452, %v475, %v476
        %v478 = vrot.slane %v476, 4
        %v479 = vrot.slane %v218, 5
        %v480 = vsel %vm452, %v478, %v479
        %v481 = vrot.slane %v422, 5
        %v482 = vrot.slane %v481, 4
        %v483 = vrot.slane %v208, 5
        %v484 = vsel %vm452, %v482, %v483
        %v485 = vrot.slane %v483, 4
        %v486 = vrot.slane %v219, 5
        %v487 = vsel %vm452, %v485, %v486
        %v488 = vrot.slane %v423, 5
        %v489 = vrot.slane %v488, 4
        %v490 = vrot.slane %v210, 5
        %v491 = vsel %vm452, %v489, %v490
        %v492 = vrot.slane %v490, 4
        %v493 = vrot.slane %v220, 5
        %v494 = vsel %vm452, %v492, %v493
        %v495 = vrot.slane %v424, 5
        %v496 = vrot.slane %v495, 4
        %v497 = vrot.slane %v212, 5
        %v498 = vsel %vm452, %v496, %v497
        %v499 = vrot.slane %v497, 4
        %v500 = vrot.slane %v221, 5
        %v501 = vsel %vm452, %v499, %v500
        %v502 = vrot.slane %v425, 5
        %v503 = vrot.slane %v502, 4
        %v504 = vrot.slane %v214, 5
        %v505 = vsel %vm452, %v503, %v504
        %v506 = vrot.slane %v504, 4
        %v507 = vrot.slane %v222, 5
        %v508 = vsel %vm452, %v506, %v507
        %s509 = scalar_lea.vmem %s196, 12
        %v510 = vld [vmem:[%s509] sm:$0xf]
        %v511 = vld [vmem:[%s509 + $0x4] sm:$0xf]
        %v512 = vld [vmem:[%s509 + $0xc] sm:$0xf]
        %v513 = vld [vmem:[%s509 + $0x10] sm:$0xf]
        %v514 = vld [vmem:[%s509 + $0x18] sm:$0xf]
        %v515 = vld [vmem:[%s509 + $0x1c] sm:$0xf]
        %v516 = vld [vmem:[%s509 + $0x24] sm:$0xf]
        %v517 = vld [vmem:[%s509 + $0x28] sm:$0xf]
        %v518 = vld [vmem:[%s509 + $0x30] sm:$0xf]
        %v519 = vld [vmem:[%s509 + $0x34] sm:$0xf]
        %v520 = vld [vmem:[%s509 + $0x3c] sm:$0xf]
        %v521 = vld [vmem:[%s509 + $0x40] sm:$0xf]
        %v522 = vld [vmem:[%s509 + $0x48] sm:$0xf]
        %v523 = vld [vmem:[%s509 + $0x4c] sm:$0xf]
        %v524 = vld [vmem:[%s509 + $0x54] sm:$0xf]
        %v525 = vld [vmem:[%s509 + $0x58] sm:$0xf]
        %v526 = vld [vmem:[%s509 + $0x8] sm:$0x1]
        %v527 = vld [vmem:[%s509 + $0x14] sm:$0x1]
        %v528 = vld [vmem:[%s509 + $0x20] sm:$0x1]
        %v529 = vld [vmem:[%s509 + $0x2c] sm:$0x1]
        %v530 = vld [vmem:[%s509 + $0x38] sm:$0x1]
        %v531 = vld [vmem:[%s509 + $0x44] sm:$0x1]
        %v532 = vld [vmem:[%s509 + $0x50] sm:$0x1]
        %v533 = vld [vmem:[%s509 + $0x5c] sm:$0x1]
        %v535 = vshrl.u32 %v510, 16
        %v537 = vrot.slane %v535, 4
        %v538 = vshll.u32 %v510, 16
        %v540 = vrot.slane %v538, 5
        %v541 = vor.u32 %v537, %v540
        %v542 = vrot.slane %v541, 4
        %v544 = vshll.u32 %v511, 16
        %v546 = vrot.slane %v544, 5
        %v547 = vsel %vm225, %v542, %v546
        %v548 = vshrl.u32 %v511, 16
        %v550 = vrot.slane %v548, 4
        %v551 = vor.u32 %v550, %v546
        %v552 = vrot.slane %v551, 4
        %v554 = vshll.u32 %v526, 16
        %v556 = vrot.slane %v554, 5
        %v557 = vsel %vm225, %v552, %v556
        %v559 = vshrl.u32 %v512, 16
        %v561 = vrot.slane %v559, 4
        %v562 = vshll.u32 %v512, 16
        %v564 = vrot.slane %v562, 5
        %v565 = vor.u32 %v561, %v564
        %v566 = vrot.slane %v565, 4
        %v568 = vshll.u32 %v513, 16
        %v570 = vrot.slane %v568, 5
        %v571 = vsel %vm225, %v566, %v570
        %v572 = vshrl.u32 %v513, 16
        %v574 = vrot.slane %v572, 4
        %v575 = vor.u32 %v574, %v570
        %v576 = vrot.slane %v575, 4
        %v578 = vshll.u32 %v527, 16
        %v580 = vrot.slane %v578, 5
        %v581 = vsel %vm225, %v576, %v580
        %v583 = vshrl.u32 %v514, 16
        %v585 = vrot.slane %v583, 4
        %v586 = vshll.u32 %v514, 16
        %v588 = vrot.slane %v586, 5
        %v589 = vor.u32 %v585, %v588
        %v590 = vrot.slane %v589, 4
        %v592 = vshll.u32 %v515, 16
        %v594 = vrot.slane %v592, 5
        %v595 = vsel %vm225, %v590, %v594
        %v596 = vshrl.u32 %v515, 16
        %v598 = vrot.slane %v596, 4
        %v599 = vor.u32 %v598, %v594
        %v600 = vrot.slane %v599, 4
        %v602 = vshll.u32 %v528, 16
        %v604 = vrot.slane %v602, 5
        %v605 = vsel %vm225, %v600, %v604
        %v607 = vshrl.u32 %v516, 16
        %v609 = vrot.slane %v607, 4
        %v610 = vshll.u32 %v516, 16
        %v612 = vrot.slane %v610, 5
        %v613 = vor.u32 %v609, %v612
        %v614 = vrot.slane %v613, 4
        %v616 = vshll.u32 %v517, 16
        %v618 = vrot.slane %v616, 5
        %v619 = vsel %vm225, %v614, %v618
        %v620 = vshrl.u32 %v517, 16
        %v622 = vrot.slane %v620, 4
        %v623 = vor.u32 %v622, %v618
        %v624 = vrot.slane %v623, 4
        %v626 = vshll.u32 %v529, 16
        %v628 = vrot.slane %v626, 5
        %v629 = vsel %vm225, %v624, %v628
        %v631 = vshrl.u32 %v518, 16
        %v633 = vrot.slane %v631, 4
        %v634 = vshll.u32 %v518, 16
        %v636 = vrot.slane %v634, 5
        %v637 = vor.u32 %v633, %v636
        %v638 = vrot.slane %v637, 4
        %v640 = vshll.u32 %v519, 16
        %v642 = vrot.slane %v640, 5
        %v643 = vsel %vm225, %v638, %v642
        %v644 = vshrl.u32 %v519, 16
        %v646 = vrot.slane %v644, 4
        %v647 = vor.u32 %v646, %v642
        %v648 = vrot.slane %v647, 4
        %v650 = vshll.u32 %v530, 16
        %v652 = vrot.slane %v650, 5
        %v653 = vsel %vm225, %v648, %v652
        %v655 = vshrl.u32 %v520, 16
        %v657 = vrot.slane %v655, 4
        %v658 = vshll.u32 %v520, 16
        %v660 = vrot.slane %v658, 5
        %v661 = vor.u32 %v657, %v660
        %v662 = vrot.slane %v661, 4
        %v664 = vshll.u32 %v521, 16
        %v666 = vrot.slane %v664, 5
        %v667 = vsel %vm225, %v662, %v666
        %v668 = vshrl.u32 %v521, 16
        %v670 = vrot.slane %v668, 4
        %v671 = vor.u32 %v670, %v666
        %v672 = vrot.slane %v671, 4
        %v674 = vshll.u32 %v531, 16
        %v676 = vrot.slane %v674, 5
        %v677 = vsel %vm225, %v672, %v676
        %v679 = vshrl.u32 %v522, 16
        %v681 = vrot.slane %v679, 4
        %v682 = vshll.u32 %v522, 16
        %v684 = vrot.slane %v682, 5
        %v685 = vor.u32 %v681, %v684
        %v686 = vrot.slane %v685, 4
        %v688 = vshll.u32 %v523, 16
        %v690 = vrot.slane %v688, 5
        %v691 = vsel %vm225, %v686, %v690
        %v692 = vshrl.u32 %v523, 16
        %v694 = vrot.slane %v692, 4
        %v695 = vor.u32 %v694, %v690
        %v696 = vrot.slane %v695, 4
        %v698 = vshll.u32 %v532, 16
        %v700 = vrot.slane %v698, 5
        %v701 = vsel %vm225, %v696, %v700
        %v703 = vshrl.u32 %v524, 16
        %v705 = vrot.slane %v703, 4
        %v706 = vshll.u32 %v524, 16
        %v708 = vrot.slane %v706, 5
        %v709 = vor.u32 %v705, %v708
        %v710 = vrot.slane %v709, 4
        %v712 = vshll.u32 %v525, 16
        %v714 = vrot.slane %v712, 5
        %v715 = vsel %vm225, %v710, %v714
        %v716 = vshrl.u32 %v525, 16
        %v718 = vrot.slane %v716, 4
        %v719 = vor.u32 %v718, %v714
        %v720 = vrot.slane %v719, 4
        %v722 = vshll.u32 %v533, 16
        %v724 = vrot.slane %v722, 5
        %v725 = vsel %vm225, %v720, %v724
        %v726 = vld [vmem:[%s509] sm:$0xe]
        %v727 = vld [vmem:[%s509 + $0xc] sm:$0xe]
        %v728 = vld [vmem:[%s509 + $0x18] sm:$0xe]
        %v729 = vld [vmem:[%s509 + $0x24] sm:$0xe]
        %v730 = vld [vmem:[%s509 + $0x30] sm:$0xe]
        %v731 = vld [vmem:[%s509 + $0x3c] sm:$0xe]
        %v732 = vld [vmem:[%s509 + $0x48] sm:$0xe]
        %v733 = vld [vmem:[%s509 + $0x54] sm:$0xe]
        %v758 = vrot.slane %v726, 5
        %v759 = vrot.slane %v758, 4
        %v760 = vrot.slane %v511, 5
        %v761 = vsel %vm452, %v759, %v760
        %v762 = vrot.slane %v760, 4
        %v763 = vrot.slane %v526, 5
        %v764 = vsel %vm452, %v762, %v763
        %v765 = vrot.slane %v727, 5
        %v766 = vrot.slane %v765, 4
        %v767 = vrot.slane %v513, 5
        %v768 = vsel %vm452, %v766, %v767
        %v769 = vrot.slane %v767, 4
        %v770 = vrot.slane %v527, 5
        %v771 = vsel %vm452, %v769, %v770
        %v772 = vrot.slane %v728, 5
        %v773 = vrot.slane %v772, 4
        %v774 = vrot.slane %v515, 5
        %v775 = vsel %vm452, %v773, %v774
        %v776 = vrot.slane %v774, 4
        %v777 = vrot.slane %v528, 5
        %v778 = vsel %vm452, %v776, %v777
        %v779 = vrot.slane %v729, 5
        %v780 = vrot.slane %v779, 4
        %v781 = vrot.slane %v517, 5
        %v782 = vsel %vm452, %v780, %v781
        %v783 = vrot.slane %v781, 4
        %v784 = vrot.slane %v529, 5
        %v785 = vsel %vm452, %v783, %v784
        %v786 = vrot.slane %v730, 5
        %v787 = vrot.slane %v786, 4
        %v788 = vrot.slane %v519, 5
        %v789 = vsel %vm452, %v787, %v788
        %v790 = vrot.slane %v788, 4
        %v791 = vrot.slane %v530, 5
        %v792 = vsel %vm452, %v790, %v791
        %v793 = vrot.slane %v731, 5
        %v794 = vrot.slane %v793, 4
        %v795 = vrot.slane %v521, 5
        %v796 = vsel %vm452, %v794, %v795
        %v797 = vrot.slane %v795, 4
        %v798 = vrot.slane %v531, 5
        %v799 = vsel %vm452, %v797, %v798
        %v800 = vrot.slane %v732, 5
        %v801 = vrot.slane %v800, 4
        %v802 = vrot.slane %v523, 5
        %v803 = vsel %vm452, %v801, %v802
        %v804 = vrot.slane %v802, 4
        %v805 = vrot.slane %v532, 5
        %v806 = vsel %vm452, %v804, %v805
        %v807 = vrot.slane %v733, 5
        %v808 = vrot.slane %v807, 4
        %v809 = vrot.slane %v525, 5
        %v810 = vsel %vm452, %v808, %v809
        %v811 = vrot.slane %v809, 4
        %v812 = vrot.slane %v533, 5
        %v813 = vsel %vm452, %v811, %v812
        %s814 = scalar_lea.vmem %s196, 24
        %v815 = vld [vmem:[%s814] sm:$0xf]
        %v816 = vld [vmem:[%s814 + $0x4] sm:$0xf]
        %v817 = vld [vmem:[%s814 + $0xc] sm:$0xf]
        %v818 = vld [vmem:[%s814 + $0x10] sm:$0xf]
        %v819 = vld [vmem:[%s814 + $0x18] sm:$0xf]
        %v820 = vld [vmem:[%s814 + $0x1c] sm:$0xf]
        %v821 = vld [vmem:[%s814 + $0x24] sm:$0xf]
        %v822 = vld [vmem:[%s814 + $0x28] sm:$0xf]
        %v823 = vld [vmem:[%s814 + $0x30] sm:$0xf]
        %v824 = vld [vmem:[%s814 + $0x34] sm:$0xf]
        %v825 = vld [vmem:[%s814 + $0x3c] sm:$0xf]
        %v826 = vld [vmem:[%s814 + $0x40] sm:$0xf]
        %v827 = vld [vmem:[%s814 + $0x48] sm:$0xf]
        %v828 = vld [vmem:[%s814 + $0x4c] sm:$0xf]
        %v829 = vld [vmem:[%s814 + $0x54] sm:$0xf]
        %v830 = vld [vmem:[%s814 + $0x58] sm:$0xf]
        %v831 = vld [vmem:[%s814 + $0x8] sm:$0x1]
        %v832 = vld [vmem:[%s814 + $0x14] sm:$0x1]
        %v833 = vld [vmem:[%s814 + $0x20] sm:$0x1]
        %v834 = vld [vmem:[%s814 + $0x2c] sm:$0x1]
        %v835 = vld [vmem:[%s814 + $0x38] sm:$0x1]
        %v836 = vld [vmem:[%s814 + $0x44] sm:$0x1]
        %v837 = vld [vmem:[%s814 + $0x50] sm:$0x1]
        %v838 = vld [vmem:[%s814 + $0x5c] sm:$0x1]
        %v840 = vshrl.u32 %v815, 16
        %v842 = vrot.slane %v840, 4
        %v843 = vshll.u32 %v815, 16
        %v845 = vrot.slane %v843, 5
        %v846 = vor.u32 %v842, %v845
        %v847 = vrot.slane %v846, 4
        %v849 = vshll.u32 %v816, 16
        %v851 = vrot.slane %v849, 5
        %v852 = vsel %vm225, %v847, %v851
        %v853 = vshrl.u32 %v816, 16
        %v855 = vrot.slane %v853, 4
        %v856 = vor.u32 %v855, %v851
        %v857 = vrot.slane %v856, 4
        %v859 = vshll.u32 %v831, 16
        %v861 = vrot.slane %v859, 5
        %v862 = vsel %vm225, %v857, %v861
        %v864 = vshrl.u32 %v817, 16
        %v866 = vrot.slane %v864, 4
        %v867 = vshll.u32 %v817, 16
        %v869 = vrot.slane %v867, 5
        %v870 = vor.u32 %v866, %v869
        %v871 = vrot.slane %v870, 4
        %v873 = vshll.u32 %v818, 16
        %v875 = vrot.slane %v873, 5
        %v876 = vsel %vm225, %v871, %v875
        %v877 = vshrl.u32 %v818, 16
        %v879 = vrot.slane %v877, 4
        %v880 = vor.u32 %v879, %v875
        %v881 = vrot.slane %v880, 4
        %v883 = vshll.u32 %v832, 16
        %v885 = vrot.slane %v883, 5
        %v886 = vsel %vm225, %v881, %v885
        %v888 = vshrl.u32 %v819, 16
        %v890 = vrot.slane %v888, 4
        %v891 = vshll.u32 %v819, 16
        %v893 = vrot.slane %v891, 5
        %v894 = vor.u32 %v890, %v893
        %v895 = vrot.slane %v894, 4
        %v897 = vshll.u32 %v820, 16
        %v899 = vrot.slane %v897, 5
        %v900 = vsel %vm225, %v895, %v899
        %v901 = vshrl.u32 %v820, 16
        %v903 = vrot.slane %v901, 4
        %v904 = vor.u32 %v903, %v899
        %v905 = vrot.slane %v904, 4
        %v907 = vshll.u32 %v833, 16
        %v909 = vrot.slane %v907, 5
        %v910 = vsel %vm225, %v905, %v909
        %v912 = vshrl.u32 %v821, 16
        %v914 = vrot.slane %v912, 4
        %v915 = vshll.u32 %v821, 16
        %v917 = vrot.slane %v915, 5
        %v918 = vor.u32 %v914, %v917
        %v919 = vrot.slane %v918, 4
        %v921 = vshll.u32 %v822, 16
        %v923 = vrot.slane %v921, 5
        %v924 = vsel %vm225, %v919, %v923
        %v925 = vshrl.u32 %v822, 16
        %v927 = vrot.slane %v925, 4
        %v928 = vor.u32 %v927, %v923
        %v929 = vrot.slane %v928, 4
        %v931 = vshll.u32 %v834, 16
        %v933 = vrot.slane %v931, 5
        %v934 = vsel %vm225, %v929, %v933
        %v936 = vshrl.u32 %v823, 16
        %v938 = vrot.slane %v936, 4
        %v939 = vshll.u32 %v823, 16
        %v941 = vrot.slane %v939, 5
        %v942 = vor.u32 %v938, %v941
        %v943 = vrot.slane %v942, 4
        %v945 = vshll.u32 %v824, 16
        %v947 = vrot.slane %v945, 5
        %v948 = vsel %vm225, %v943, %v947
        %v949 = vshrl.u32 %v824, 16
        %v951 = vrot.slane %v949, 4
        %v952 = vor.u32 %v951, %v947
        %v953 = vrot.slane %v952, 4
        %v955 = vshll.u32 %v835, 16
        %v957 = vrot.slane %v955, 5
        %v958 = vsel %vm225, %v953, %v957
        %v960 = vshrl.u32 %v825, 16
        %v962 = vrot.slane %v960, 4
        %v963 = vshll.u32 %v825, 16
        %v965 = vrot.slane %v963, 5
        %v966 = vor.u32 %v962, %v965
        %v967 = vrot.slane %v966, 4
        %v969 = vshll.u32 %v826, 16
        %v971 = vrot.slane %v969, 5
        %v972 = vsel %vm225, %v967, %v971
        %v973 = vshrl.u32 %v826, 16
        %v975 = vrot.slane %v973, 4
        %v976 = vor.u32 %v975, %v971
        %v977 = vrot.slane %v976, 4
        %v979 = vshll.u32 %v836, 16
        %v981 = vrot.slane %v979, 5
        %v982 = vsel %vm225, %v977, %v981
        %v984 = vshrl.u32 %v827, 16
        %v986 = vrot.slane %v984, 4
        %v987 = vshll.u32 %v827, 16
        %v989 = vrot.slane %v987, 5
        %v990 = vor.u32 %v986, %v989
        %v991 = vrot.slane %v990, 4
        %v993 = vshll.u32 %v828, 16
        %v995 = vrot.slane %v993, 5
        %v996 = vsel %vm225, %v991, %v995
        %v997 = vshrl.u32 %v828, 16
        %v999 = vrot.slane %v997, 4
        %v1000 = vor.u32 %v999, %v995
        %v1001 = vrot.slane %v1000, 4
        %v1003 = vshll.u32 %v837, 16
        %v1005 = vrot.slane %v1003, 5
        %v1006 = vsel %vm225, %v1001, %v1005
        %v1008 = vshrl.u32 %v829, 16
        %v1010 = vrot.slane %v1008, 4
        %v1011 = vshll.u32 %v829, 16
        %v1013 = vrot.slane %v1011, 5
        %v1014 = vor.u32 %v1010, %v1013
        %v1015 = vrot.slane %v1014, 4
        %v1017 = vshll.u32 %v830, 16
        %v1019 = vrot.slane %v1017, 5
        %v1020 = vsel %vm225, %v1015, %v1019
        %v1021 = vshrl.u32 %v830, 16
        %v1023 = vrot.slane %v1021, 4
        %v1024 = vor.u32 %v1023, %v1019
        %v1025 = vrot.slane %v1024, 4
        %v1027 = vshll.u32 %v838, 16
        %v1029 = vrot.slane %v1027, 5
        %v1030 = vsel %vm225, %v1025, %v1029
        %v1031 = vld [vmem:[%s814] sm:$0xe]
        %v1032 = vld [vmem:[%s814 + $0xc] sm:$0xe]
        %v1033 = vld [vmem:[%s814 + $0x18] sm:$0xe]
        %v1034 = vld [vmem:[%s814 + $0x24] sm:$0xe]
        %v1035 = vld [vmem:[%s814 + $0x30] sm:$0xe]
        %v1036 = vld [vmem:[%s814 + $0x3c] sm:$0xe]
        %v1037 = vld [vmem:[%s814 + $0x48] sm:$0xe]
        %v1038 = vld [vmem:[%s814 + $0x54] sm:$0xe]
        %v1063 = vrot.slane %v1031, 5
        %v1064 = vrot.slane %v1063, 4
        %v1065 = vrot.slane %v816, 5
        %v1066 = vsel %vm452, %v1064, %v1065
        %v1067 = vrot.slane %v1065, 4
        %v1068 = vrot.slane %v831, 5
        %v1069 = vsel %vm452, %v1067, %v1068
        %v1070 = vrot.slane %v1032, 5
        %v1071 = vrot.slane %v1070, 4
        %v1072 = vrot.slane %v818, 5
        %v1073 = vsel %vm452, %v1071, %v1072
        %v1074 = vrot.slane %v1072, 4
        %v1075 = vrot.slane %v832, 5
        %v1076 = vsel %vm452, %v1074, %v1075
        %v1077 = vrot.slane %v1033, 5
        %v1078 = vrot.slane %v1077, 4
        %v1079 = vrot.slane %v820, 5
        %v1080 = vsel %vm452, %v1078, %v1079
        %v1081 = vrot.slane %v1079, 4
        %v1082 = vrot.slane %v833, 5
        %v1083 = vsel %vm452, %v1081, %v1082
        %v1084 = vrot.slane %v1034, 5
        %v1085 = vrot.slane %v1084, 4
        %v1086 = vrot.slane %v822, 5
        %v1087 = vsel %vm452, %v1085, %v1086
        %v1088 = vrot.slane %v1086, 4
        %v1089 = vrot.slane %v834, 5
        %v1090 = vsel %vm452, %v1088, %v1089
        %v1091 = vrot.slane %v1035, 5
        %v1092 = vrot.slane %v1091, 4
        %v1093 = vrot.slane %v824, 5
        %v1094 = vsel %vm452, %v1092, %v1093
        %v1095 = vrot.slane %v1093, 4
        %v1096 = vrot.slane %v835, 5
        %v1097 = vsel %vm452, %v1095, %v1096
        %v1098 = vrot.slane %v1036, 5
        %v1099 = vrot.slane %v1098, 4
        %v1100 = vrot.slane %v826, 5
        %v1101 = vsel %vm452, %v1099, %v1100
        %v1102 = vrot.slane %v1100, 4
        %v1103 = vrot.slane %v836, 5
        %v1104 = vsel %vm452, %v1102, %v1103
        %v1105 = vrot.slane %v1037, 5
        %v1106 = vrot.slane %v1105, 4
        %v1107 = vrot.slane %v828, 5
        %v1108 = vsel %vm452, %v1106, %v1107
        %v1109 = vrot.slane %v1107, 4
        %v1110 = vrot.slane %v837, 5
        %v1111 = vsel %vm452, %v1109, %v1110
        %v1112 = vrot.slane %v1038, 5
        %v1113 = vrot.slane %v1112, 4
        %v1114 = vrot.slane %v830, 5
        %v1115 = vsel %vm452, %v1113, %v1114
        %v1116 = vrot.slane %v1114, 4
        %v1117 = vrot.slane %v838, 5
        %v1118 = vsel %vm452, %v1116, %v1117
        %v1127 = vunpack.c.l.b16 %v199
        %v1128 = vunpack.c.l.b16 %v200
        %v1129 = vunpack.c.l.b16 %v201
        %v1130 = vunpack.c.l.b16 %v202
        %v1131 = vunpack.c.l.b16 %v203
        %v1132 = vunpack.c.l.b16 %v204
        %v1133 = vunpack.c.l.b16 %v205
        %v1134 = vunpack.c.l.b16 %v206
        %v1135 = vunpack.c.l.b16 %v207
        %v1136 = vunpack.c.l.b16 %v208
        %v1137 = vunpack.c.l.b16 %v209
        %v1138 = vunpack.c.l.b16 %v210
        %v1139 = vunpack.c.l.b16 %v211
        %v1140 = vunpack.c.l.b16 %v212
        %v1141 = vunpack.c.l.b16 %v213
        %v1142 = vunpack.c.l.b16 %v214
        %v1143 = vpack.c.b16 %v1128, %v1127
        %v1144 = vpack.c.b16 %v1130, %v1129
        %v1145 = vpack.c.b16 %v1132, %v1131
        %v1146 = vpack.c.b16 %v1134, %v1133
        %v1147 = vpack.c.b16 %v1136, %v1135
        %v1148 = vpack.c.b16 %v1138, %v1137
        %v1149 = vpack.c.b16 %v1140, %v1139
        %v1150 = vpack.c.b16 %v1142, %v1141
        %v1151 = vunpack.c.l.b16 %v239
        %v1152 = vunpack.c.l.b16 %v249
        %v1153 = vunpack.c.l.b16 %v263
        %v1154 = vunpack.c.l.b16 %v273
        %v1155 = vunpack.c.l.b16 %v287
        %v1156 = vunpack.c.l.b16 %v297
        %v1157 = vunpack.c.l.b16 %v311
        %v1158 = vunpack.c.l.b16 %v321
        %v1159 = vunpack.c.l.b16 %v335
        %v1160 = vunpack.c.l.b16 %v345
        %v1161 = vunpack.c.l.b16 %v359
        %v1162 = vunpack.c.l.b16 %v369
        %v1163 = vunpack.c.l.b16 %v383
        %v1164 = vunpack.c.l.b16 %v393
        %v1165 = vunpack.c.l.b16 %v407
        %v1166 = vunpack.c.l.b16 %v417
        %v1167 = vpack.c.b16 %v1152, %v1151
        %v1168 = vpack.c.b16 %v1154, %v1153
        %v1169 = vpack.c.b16 %v1156, %v1155
        %v1170 = vpack.c.b16 %v1158, %v1157
        %v1171 = vpack.c.b16 %v1160, %v1159
        %v1172 = vpack.c.b16 %v1162, %v1161
        %v1173 = vpack.c.b16 %v1164, %v1163
        %v1174 = vpack.c.b16 %v1166, %v1165
        %1175 = vrot.lane.b32.xlu0 %v1167, 4
        %v1176 = vpop.permute.xlu0 %1175
        %1177 = vrot.lane.b32.xlu0 %v1168, 4
        %v1178 = vpop.permute.xlu0 %1177
        %1179 = vrot.lane.b32.xlu0 %v1169, 4
        %v1180 = vpop.permute.xlu0 %1179
        %1181 = vrot.lane.b32.xlu0 %v1170, 4
        %v1182 = vpop.permute.xlu0 %1181
        %1183 = vrot.lane.b32.xlu0 %v1171, 4
        %v1184 = vpop.permute.xlu0 %1183
        %1185 = vrot.lane.b32.xlu0 %v1172, 4
        %v1186 = vpop.permute.xlu0 %1185
        %1187 = vrot.lane.b32.xlu0 %v1173, 4
        %v1188 = vpop.permute.xlu0 %1187
        %1189 = vrot.lane.b32.xlu0 %v1174, 4
        %v1190 = vpop.permute.xlu0 %1189
        %v1191 = vunpack.c.l.b16 %v456
        %v1192 = vunpack.c.l.b16 %v459
        %v1193 = vunpack.c.l.b16 %v463
        %v1194 = vunpack.c.l.b16 %v466
        %v1195 = vunpack.c.l.b16 %v470
        %v1196 = vunpack.c.l.b16 %v473
        %v1197 = vunpack.c.l.b16 %v477
        %v1198 = vunpack.c.l.b16 %v480
        %v1199 = vunpack.c.l.b16 %v484
        %v1200 = vunpack.c.l.b16 %v487
        %v1201 = vunpack.c.l.b16 %v491
        %v1202 = vunpack.c.l.b16 %v494
        %v1203 = vunpack.c.l.b16 %v498
        %v1204 = vunpack.c.l.b16 %v501
        %v1205 = vunpack.c.l.b16 %v505
        %v1206 = vunpack.c.l.b16 %v508
        %v1207 = vpack.c.b16 %v1192, %v1191
        %v1208 = vpack.c.b16 %v1194, %v1193
        %v1209 = vpack.c.b16 %v1196, %v1195
        %v1210 = vpack.c.b16 %v1198, %v1197
        %v1211 = vpack.c.b16 %v1200, %v1199
        %v1212 = vpack.c.b16 %v1202, %v1201
        %v1213 = vpack.c.b16 %v1204, %v1203
        %v1214 = vpack.c.b16 %v1206, %v1205
        %1215 = vrot.lane.b32.xlu0 %v1207, 8
        %v1216 = vpop.permute.xlu0 %1215
        %1217 = vrot.lane.b32.xlu0 %v1208, 8
        %v1218 = vpop.permute.xlu0 %1217
        %1219 = vrot.lane.b32.xlu0 %v1209, 8
        %v1220 = vpop.permute.xlu0 %1219
        %1221 = vrot.lane.b32.xlu0 %v1210, 8
        %v1222 = vpop.permute.xlu0 %1221
        %1223 = vrot.lane.b32.xlu0 %v1211, 8
        %v1224 = vpop.permute.xlu0 %1223
        %1225 = vrot.lane.b32.xlu0 %v1212, 8
        %v1226 = vpop.permute.xlu0 %1225
        %1227 = vrot.lane.b32.xlu0 %v1213, 8
        %v1228 = vpop.permute.xlu0 %1227
        %1229 = vrot.lane.b32.xlu0 %v1214, 8
        %v1230 = vpop.permute.xlu0 %1229
        %v1239 = vunpack.c.l.b16 %v510
        %v1240 = vunpack.c.l.b16 %v511
        %v1241 = vunpack.c.l.b16 %v512
        %v1242 = vunpack.c.l.b16 %v513
        %v1243 = vunpack.c.l.b16 %v514
        %v1244 = vunpack.c.l.b16 %v515
        %v1245 = vunpack.c.l.b16 %v516
        %v1246 = vunpack.c.l.b16 %v517
        %v1247 = vunpack.c.l.b16 %v518
        %v1248 = vunpack.c.l.b16 %v519
        %v1249 = vunpack.c.l.b16 %v520
        %v1250 = vunpack.c.l.b16 %v521
        %v1251 = vunpack.c.l.b16 %v522
        %v1252 = vunpack.c.l.b16 %v523
        %v1253 = vunpack.c.l.b16 %v524
        %v1254 = vunpack.c.l.b16 %v525
        %v1255 = vpack.c.b16 %v1240, %v1239
        %v1256 = vpack.c.b16 %v1242, %v1241
        %v1257 = vpack.c.b16 %v1244, %v1243
        %v1258 = vpack.c.b16 %v1246, %v1245
        %v1259 = vpack.c.b16 %v1248, %v1247
        %v1260 = vpack.c.b16 %v1250, %v1249
        %v1261 = vpack.c.b16 %v1252, %v1251
        %v1262 = vpack.c.b16 %v1254, %v1253
        %1263 = vrot.lane.b32.xlu0 %v1255, 12
        %v1264 = vpop.permute.xlu0 %1263
        %1265 = vrot.lane.b32.xlu0 %v1256, 12
        %v1266 = vpop.permute.xlu0 %1265
        %1267 = vrot.lane.b32.xlu0 %v1257, 12
        %v1268 = vpop.permute.xlu0 %1267
        %1269 = vrot.lane.b32.xlu0 %v1258, 12
        %v1270 = vpop.permute.xlu0 %1269
        %1271 = vrot.lane.b32.xlu0 %v1259, 12
        %v1272 = vpop.permute.xlu0 %1271
        %1273 = vrot.lane.b32.xlu0 %v1260, 12
        %v1274 = vpop.permute.xlu0 %1273
        %1275 = vrot.lane.b32.xlu0 %v1261, 12
        %v1276 = vpop.permute.xlu0 %1275
        %1277 = vrot.lane.b32.xlu0 %v1262, 12
        %v1278 = vpop.permute.xlu0 %1277
        %v1279 = vunpack.c.l.b16 %v547
        %v1280 = vunpack.c.l.b16 %v557
        %v1281 = vunpack.c.l.b16 %v571
        %v1282 = vunpack.c.l.b16 %v581
        %v1283 = vunpack.c.l.b16 %v595
        %v1284 = vunpack.c.l.b16 %v605
        %v1285 = vunpack.c.l.b16 %v619
        %v1286 = vunpack.c.l.b16 %v629
        %v1287 = vunpack.c.l.b16 %v643
        %v1288 = vunpack.c.l.b16 %v653
        %v1289 = vunpack.c.l.b16 %v667
        %v1290 = vunpack.c.l.b16 %v677
        %v1291 = vunpack.c.l.b16 %v691
        %v1292 = vunpack.c.l.b16 %v701
        %v1293 = vunpack.c.l.b16 %v715
        %v1294 = vunpack.c.l.b16 %v725
        %v1295 = vpack.c.b16 %v1280, %v1279
        %v1296 = vpack.c.b16 %v1282, %v1281
        %v1297 = vpack.c.b16 %v1284, %v1283
        %v1298 = vpack.c.b16 %v1286, %v1285
        %v1299 = vpack.c.b16 %v1288, %v1287
        %v1300 = vpack.c.b16 %v1290, %v1289
        %v1301 = vpack.c.b16 %v1292, %v1291
        %v1302 = vpack.c.b16 %v1294, %v1293
        %1303 = vrot.lane.b32.xlu0 %v1295, 16
        %v1304 = vpop.permute.xlu0 %1303
        %1305 = vrot.lane.b32.xlu0 %v1296, 16
        %v1306 = vpop.permute.xlu0 %1305
        %1307 = vrot.lane.b32.xlu0 %v1297, 16
        %v1308 = vpop.permute.xlu0 %1307
        %1309 = vrot.lane.b32.xlu0 %v1298, 16
        %v1310 = vpop.permute.xlu0 %1309
        %1311 = vrot.lane.b32.xlu0 %v1299, 16
        %v1312 = vpop.permute.xlu0 %1311
        %1313 = vrot.lane.b32.xlu0 %v1300, 16
        %v1314 = vpop.permute.xlu0 %1313
        %1315 = vrot.lane.b32.xlu0 %v1301, 16
        %v1316 = vpop.permute.xlu0 %1315
        %1317 = vrot.lane.b32.xlu0 %v1302, 16
        %v1318 = vpop.permute.xlu0 %1317
        %v1319 = vunpack.c.l.b16 %v761
        %v1320 = vunpack.c.l.b16 %v764
        %v1321 = vunpack.c.l.b16 %v768
        %v1322 = vunpack.c.l.b16 %v771
        %v1323 = vunpack.c.l.b16 %v775
        %v1324 = vunpack.c.l.b16 %v778
        %v1325 = vunpack.c.l.b16 %v782
        %v1326 = vunpack.c.l.b16 %v785
        %v1327 = vunpack.c.l.b16 %v789
        %v1328 = vunpack.c.l.b16 %v792
        %v1329 = vunpack.c.l.b16 %v796
        %v1330 = vunpack.c.l.b16 %v799
        %v1331 = vunpack.c.l.b16 %v803
        %v1332 = vunpack.c.l.b16 %v806
        %v1333 = vunpack.c.l.b16 %v810
        %v1334 = vunpack.c.l.b16 %v813
        %v1335 = vpack.c.b16 %v1320, %v1319
        %v1336 = vpack.c.b16 %v1322, %v1321
        %v1337 = vpack.c.b16 %v1324, %v1323
        %v1338 = vpack.c.b16 %v1326, %v1325
        %v1339 = vpack.c.b16 %v1328, %v1327
        %v1340 = vpack.c.b16 %v1330, %v1329
        %v1341 = vpack.c.b16 %v1332, %v1331
        %v1342 = vpack.c.b16 %v1334, %v1333
        %1343 = vrot.lane.b32.xlu0 %v1335, 20
        %v1344 = vpop.permute.xlu0 %1343
        %1345 = vrot.lane.b32.xlu0 %v1336, 20
        %v1346 = vpop.permute.xlu0 %1345
        %1347 = vrot.lane.b32.xlu0 %v1337, 20
        %v1348 = vpop.permute.xlu0 %1347
        %1349 = vrot.lane.b32.xlu0 %v1338, 20
        %v1350 = vpop.permute.xlu0 %1349
        %1351 = vrot.lane.b32.xlu0 %v1339, 20
        %v1352 = vpop.permute.xlu0 %1351
        %1353 = vrot.lane.b32.xlu0 %v1340, 20
        %v1354 = vpop.permute.xlu0 %1353
        %1355 = vrot.lane.b32.xlu0 %v1341, 20
        %v1356 = vpop.permute.xlu0 %1355
        %1357 = vrot.lane.b32.xlu0 %v1342, 20
        %v1358 = vpop.permute.xlu0 %1357
        %v1367 = vunpack.c.l.b16 %v815
        %v1368 = vunpack.c.l.b16 %v816
        %v1369 = vunpack.c.l.b16 %v817
        %v1370 = vunpack.c.l.b16 %v818
        %v1371 = vunpack.c.l.b16 %v819
        %v1372 = vunpack.c.l.b16 %v820
        %v1373 = vunpack.c.l.b16 %v821
        %v1374 = vunpack.c.l.b16 %v822
        %v1375 = vunpack.c.l.b16 %v823
        %v1376 = vunpack.c.l.b16 %v824
        %v1377 = vunpack.c.l.b16 %v825
        %v1378 = vunpack.c.l.b16 %v826
        %v1379 = vunpack.c.l.b16 %v827
        %v1380 = vunpack.c.l.b16 %v828
        %v1381 = vunpack.c.l.b16 %v829
        %v1382 = vunpack.c.l.b16 %v830
        %v1383 = vpack.c.b16 %v1368, %v1367
        %v1384 = vpack.c.b16 %v1370, %v1369
        %v1385 = vpack.c.b16 %v1372, %v1371
        %v1386 = vpack.c.b16 %v1374, %v1373
        %v1387 = vpack.c.b16 %v1376, %v1375
        %v1388 = vpack.c.b16 %v1378, %v1377
        %v1389 = vpack.c.b16 %v1380, %v1379
        %v1390 = vpack.c.b16 %v1382, %v1381
        %1391 = vrot.lane.b32.xlu0 %v1383, 24
        %v1392 = vpop.permute.xlu0 %1391
        %1393 = vrot.lane.b32.xlu0 %v1384, 24
        %v1394 = vpop.permute.xlu0 %1393
        %1395 = vrot.lane.b32.xlu0 %v1385, 24
        %v1396 = vpop.permute.xlu0 %1395
        %1397 = vrot.lane.b32.xlu0 %v1386, 24
        %v1398 = vpop.permute.xlu0 %1397
        %1399 = vrot.lane.b32.xlu0 %v1387, 24
        %v1400 = vpop.permute.xlu0 %1399
        %1401 = vrot.lane.b32.xlu0 %v1388, 24
        %v1402 = vpop.permute.xlu0 %1401
        %1403 = vrot.lane.b32.xlu0 %v1389, 24
        %v1404 = vpop.permute.xlu0 %1403
        %1405 = vrot.lane.b32.xlu0 %v1390, 24
        %v1406 = vpop.permute.xlu0 %1405
        %v1407 = vunpack.c.l.b16 %v852
        %v1408 = vunpack.c.l.b16 %v862
        %v1409 = vunpack.c.l.b16 %v876
        %v1410 = vunpack.c.l.b16 %v886
        %v1411 = vunpack.c.l.b16 %v900
        %v1412 = vunpack.c.l.b16 %v910
        %v1413 = vunpack.c.l.b16 %v924
        %v1414 = vunpack.c.l.b16 %v934
        %v1415 = vunpack.c.l.b16 %v948
        %v1416 = vunpack.c.l.b16 %v958
        %v1417 = vunpack.c.l.b16 %v972
        %v1418 = vunpack.c.l.b16 %v982
        %v1419 = vunpack.c.l.b16 %v996
        %v1420 = vunpack.c.l.b16 %v1006
        %v1421 = vunpack.c.l.b16 %v1020
        %v1422 = vunpack.c.l.b16 %v1030
        %v1423 = vpack.c.b16 %v1408, %v1407
        %v1424 = vpack.c.b16 %v1410, %v1409
        %v1425 = vpack.c.b16 %v1412, %v1411
        %v1426 = vpack.c.b16 %v1414, %v1413
        %v1427 = vpack.c.b16 %v1416, %v1415
        %v1428 = vpack.c.b16 %v1418, %v1417
        %v1429 = vpack.c.b16 %v1420, %v1419
        %v1430 = vpack.c.b16 %v1422, %v1421
        %1431 = vrot.lane.b32.xlu0 %v1423, 28
        %v1432 = vpop.permute.xlu0 %1431
        %1433 = vrot.lane.b32.xlu0 %v1424, 28
        %v1434 = vpop.permute.xlu0 %1433
        %1435 = vrot.lane.b32.xlu0 %v1425, 28
        %v1436 = vpop.permute.xlu0 %1435
        %1437 = vrot.lane.b32.xlu0 %v1426, 28
        %v1438 = vpop.permute.xlu0 %1437
        %1439 = vrot.lane.b32.xlu0 %v1427, 28
        %v1440 = vpop.permute.xlu0 %1439
        %1441 = vrot.lane.b32.xlu0 %v1428, 28
        %v1442 = vpop.permute.xlu0 %1441
        %1443 = vrot.lane.b32.xlu0 %v1429, 28
        %v1444 = vpop.permute.xlu0 %1443
        %1445 = vrot.lane.b32.xlu0 %v1430, 28
        %v1446 = vpop.permute.xlu0 %1445
        %v1447 = vunpack.c.l.b16 %v1066
        %v1448 = vunpack.c.l.b16 %v1069
        %v1449 = vunpack.c.l.b16 %v1073
        %v1450 = vunpack.c.l.b16 %v1076
        %v1451 = vunpack.c.l.b16 %v1080
        %v1452 = vunpack.c.l.b16 %v1083
        %v1453 = vunpack.c.l.b16 %v1087
        %v1454 = vunpack.c.l.b16 %v1090
        %v1455 = vunpack.c.l.b16 %v1094
        %v1456 = vunpack.c.l.b16 %v1097
        %v1457 = vunpack.c.l.b16 %v1101
        %v1458 = vunpack.c.l.b16 %v1104
        %v1459 = vunpack.c.l.b16 %v1108
        %v1460 = vunpack.c.l.b16 %v1111
        %v1461 = vunpack.c.l.b16 %v1115
        %v1462 = vunpack.c.l.b16 %v1118
        %v1463 = vpack.c.b16 %v1448, %v1447
        %v1464 = vpack.c.b16 %v1450, %v1449
        %v1465 = vpack.c.b16 %v1452, %v1451
        %v1466 = vpack.c.b16 %v1454, %v1453
        %v1467 = vpack.c.b16 %v1456, %v1455
        %v1468 = vpack.c.b16 %v1458, %v1457
        %v1469 = vpack.c.b16 %v1460, %v1459
        %v1470 = vpack.c.b16 %v1462, %v1461
        %1471 = vrot.lane.b32.xlu0 %v1463, 32
        %v1472 = vpop.permute.xlu0 %1471
        %1473 = vrot.lane.b32.xlu0 %v1464, 32
        %v1474 = vpop.permute.xlu0 %1473
        %1475 = vrot.lane.b32.xlu0 %v1465, 32
        %v1476 = vpop.permute.xlu0 %1475
        %1477 = vrot.lane.b32.xlu0 %v1466, 32
        %v1478 = vpop.permute.xlu0 %1477
        %1479 = vrot.lane.b32.xlu0 %v1467, 32
        %v1480 = vpop.permute.xlu0 %1479
        %1481 = vrot.lane.b32.xlu0 %v1468, 32
        %v1482 = vpop.permute.xlu0 %1481
        %1483 = vrot.lane.b32.xlu0 %v1469, 32
        %v1484 = vpop.permute.xlu0 %1483
        %1485 = vrot.lane.b32.xlu0 %v1470, 32
        %v1486 = vpop.permute.xlu0 %1485
        %vm1487 = vcmask 31744
        %v1490 = vsel %vm1487, %v1143, %v1176
        %v1493 = vsel %vm1487, %v1144, %v1178
        %v1496 = vsel %vm1487, %v1145, %v1180
        %v1499 = vsel %vm1487, %v1146, %v1182
        %v1502 = vsel %vm1487, %v1147, %v1184
        %v1505 = vsel %vm1487, %v1148, %v1186
        %v1508 = vsel %vm1487, %v1149, %v1188
        %v1511 = vsel %vm1487, %v1150, %v1190
        %vm1512 = vcmask 64512
        %v1514 = vsel %vm1512, %v1490, %v1216
        %v1516 = vsel %vm1512, %v1493, %v1218
        %v1518 = vsel %vm1512, %v1496, %v1220
        %v1520 = vsel %vm1512, %v1499, %v1222
        %v1522 = vsel %vm1512, %v1502, %v1224
        %v1524 = vsel %vm1512, %v1505, %v1226
        %v1526 = vsel %vm1512, %v1508, %v1228
        %v1528 = vsel %vm1512, %v1511, %v1230
        %vm1529 = vcmask 97280
        %v1531 = vsel %vm1529, %v1514, %v1264
        %v1533 = vsel %vm1529, %v1516, %v1266
        %v1535 = vsel %vm1529, %v1518, %v1268
        %v1537 = vsel %vm1529, %v1520, %v1270
        %v1539 = vsel %vm1529, %v1522, %v1272
        %v1541 = vsel %vm1529, %v1524, %v1274
        %v1543 = vsel %vm1529, %v1526, %v1276
        %v1545 = vsel %vm1529, %v1528, %v1278
        %vm1546 = vcmask 130048
        %v1548 = vsel %vm1546, %v1531, %v1304
        %v1550 = vsel %vm1546, %v1533, %v1306
        %v1552 = vsel %vm1546, %v1535, %v1308
        %v1554 = vsel %vm1546, %v1537, %v1310
        %v1556 = vsel %vm1546, %v1539, %v1312
        %v1558 = vsel %vm1546, %v1541, %v1314
        %v1560 = vsel %vm1546, %v1543, %v1316
        %v1562 = vsel %vm1546, %v1545, %v1318
        %vm1563 = vcmask 162816
        %v1565 = vsel %vm1563, %v1548, %v1344
        %v1567 = vsel %vm1563, %v1550, %v1346
        %v1569 = vsel %vm1563, %v1552, %v1348
        %v1571 = vsel %vm1563, %v1554, %v1350
        %v1573 = vsel %vm1563, %v1556, %v1352
        %v1575 = vsel %vm1563, %v1558, %v1354
        %v1577 = vsel %vm1563, %v1560, %v1356
        %v1579 = vsel %vm1563, %v1562, %v1358
        %vm1580 = vcmask 195584
        %v1582 = vsel %vm1580, %v1565, %v1392
        %v1584 = vsel %vm1580, %v1567, %v1394
        %v1586 = vsel %vm1580, %v1569, %v1396
        %v1588 = vsel %vm1580, %v1571, %v1398
        %v1590 = vsel %vm1580, %v1573, %v1400
        %v1592 = vsel %vm1580, %v1575, %v1402
        %v1594 = vsel %vm1580, %v1577, %v1404
        %v1596 = vsel %vm1580, %v1579, %v1406
        %vm1597 = vcmask 228352
        %v1599 = vsel %vm1597, %v1582, %v1432
        %v1601 = vsel %vm1597, %v1584, %v1434
        %v1603 = vsel %vm1597, %v1586, %v1436
        %v1605 = vsel %vm1597, %v1588, %v1438
        %v1607 = vsel %vm1597, %v1590, %v1440
        %v1609 = vsel %vm1597, %v1592, %v1442
        %v1611 = vsel %vm1597, %v1594, %v1444
        %v1613 = vsel %vm1597, %v1596, %v1446
        %vm1614 = vcmask 261120
        %v1616 = vsel %vm1614, %v1599, %v1472
        %v1618 = vsel %vm1614, %v1601, %v1474
        %v1620 = vsel %vm1614, %v1603, %v1476
        %v1622 = vsel %vm1614, %v1605, %v1478
        %v1624 = vsel %vm1614, %v1607, %v1480
        %v1626 = vsel %vm1614, %v1609, %v1482
        %v1628 = vsel %vm1614, %v1611, %v1484
        %v1630 = vsel %vm1614, %v1613, %v1486
        %v1631 = vld [vmem:[%s1] sm:$0xf]
        %v1632 = vld [vmem:[%s1 + $0x4] sm:$0xf]
        %v1633 = vld [vmem:[%s1 + $0x8] sm:$0xf]
        %v1634 = vld [vmem:[%s1 + $0xc] sm:$0xf]
        %v1635 = vld [vmem:[%s1 + $0x10] sm:$0x3]
        %v1636 = vld [vmem:[%s2] sm:$0x1]
        %v1638 = vlaneseq
        %v1639 = vshrl.u32 %v1638, 7
        %v1640 = vsub.s32 0, %v1639
        %v1641 = vrot.slane %v1636, %v1640
        %v1648 = vunpack.c.l.b16 %v1631
        %v1649 = vunpack.c.l.b16 %v1632
        %v1650 = vunpack.c.l.b16 %v1633
        %v1651 = vunpack.c.l.b16 %v1634
        %v1652 = vunpack.c.l.b16 %v1635
        %v1653 = vpack.c.b16 %v1649, %v1648
        %v1654 = vpack.c.b16 %v1651, %v1650
        %v1655 = vpack.c.b16 %v1652, %v1652
        %vm1658 = vcmask 293888
        %v1659 = vsel %vm1658, %v1616, 0
        %v1661 = vsel %vm1658, %v1618, 0
        %v1663 = vsel %vm1658, %v1620, 0
        %v1665 = vsel %vm1658, %v1622, 0
        %v1667 = vsel %vm1658, %v1624, 0
        %v1669 = vsel %vm1658, %v1626, 0
        %v1671 = vsel %vm1658, %v1628, 0
        %v1673 = vsel %vm1658, %v1630, 0
        %vm1675 = vcmask 1041408
        %v1677 = vsel %vm1675, %v1655, 0
        %1679 = vmatprep.subr.bf16.mxu0 0
        %1680 = vmatpush1.bf16.msra.mxu0 %v1653
        %1681 = vmatprep.subr.bf16.mxu0 0
        %1682 = vmatpush1.bf16.msra.mxu0 %v1654
        %1683 = vmatprep.subr.bf16.mxu0 0
        %1684 = vmatpush1.bf16.msra.mxu0 %v1677
        %1685 = vmatprep.subr.bf16.mxu0 0
        %1686 = vmatpush1.bf16.msra.mxu0 0
        %1687 = vmatprep.subr.bf16.mxu0 0
        %1688 = vmatpush1.bf16.msra.mxu0 0
        %1689 = vmatprep.subr.bf16.mxu0 0
        %1690 = vmatpush1.bf16.msra.mxu0 0
        %1691 = vmatprep.subr.bf16.mxu0 0
        %1692 = vmatpush1.bf16.msra.mxu0 0
        %1693 = vmatprep.subr.bf16.mxu0 0
        %1694 = vmatpush1.bf16.msra.mxu0 0
        %1695 = vmatprep.subr.bf16.mxu0 0
        %1696 = vmatpush1.bf16.msra.mxu0 0
        %1697 = vmatprep.subr.bf16.mxu0 0
        %1698 = vmatpush1.bf16.msra.mxu0 0
        %1699 = vmatprep.subr.bf16.mxu0 0
        %1700 = vmatpush1.bf16.msra.mxu0 0
        %1701 = vmatprep.subr.bf16.mxu0 0
        %1702 = vmatpush1.bf16.msra.mxu0 0
        %1703 = vmatprep.subr.bf16.mxu0 0
        %1704 = vmatpush1.bf16.msra.mxu0 0
        %1705 = vmatprep.subr.bf16.mxu0 0
        %1706 = vmatpush1.bf16.msra.mxu0 0
        %1707 = vmatprep.subr.bf16.mxu0 0
        %1708 = vmatpush1.bf16.msra.mxu0 0
        %1709 = vmatprep.subr.bf16.mxu0 0
        %1710 = vmatpush1.bf16.msra.mxu0 0
        %1711 = vmatprep.mubr.bf16.mxu0 0
        %1712 = vmatmul.mubr.bf16.gmra.mrb[0].mxu0 %v1659
        %v1713 = vpop.f32.mrb[0].mxu0
        %v1714 = vadd.f32 %v1641, %v1713
        %v1715 = vpop.f32.mrb[0].mxu0
        %v1716 = vpop.f32.mrb[0].mxu0
        %v1717 = vadd.f32 %v1641, %v1716
        %v1718 = vpop.f32.mrb[0].mxu0
        %1719 = vmatprep.mubr.bf16.mxu0 0
        %1720 = vmatmul.mubr.bf16.gmra.mrb[0].mxu0 %v1661
        %v1721 = vpop.f32.mrb[0].mxu0
        %v1722 = vadd.f32 %v1641, %v1721
        %v1723 = vpop.f32.mrb[0].mxu0
        %v1724 = vpop.f32.mrb[0].mxu0
        %v1725 = vadd.f32 %v1641, %v1724
        %v1726 = vpop.f32.mrb[0].mxu0
        %1727 = vmatprep.mubr.bf16.mxu0 0
        %1728 = vmatmul.mubr.bf16.gmra.mrb[0].mxu0 %v1663
        %v1729 = vpop.f32.mrb[0].mxu0
        %v1730 = vadd.f32 %v1641, %v1729
        %v1731 = vpop.f32.mrb[0].mxu0
        %v1732 = vpop.f32.mrb[0].mxu0
        %v1733 = vadd.f32 %v1641, %v1732
        %v1734 = vpop.f32.mrb[0].mxu0
        %1735 = vmatprep.mubr.bf16.mxu0 0
        %1736 = vmatmul.mubr.bf16.gmra.mrb[0].mxu0 %v1665
        %v1737 = vpop.f32.mrb[0].mxu0
        %v1738 = vadd.f32 %v1641, %v1737
        %v1739 = vpop.f32.mrb[0].mxu0
        %v1740 = vpop.f32.mrb[0].mxu0
        %v1741 = vadd.f32 %v1641, %v1740
        %v1742 = vpop.f32.mrb[0].mxu0
        %1743 = vmatprep.mubr.bf16.mxu0 0
        %1744 = vmatmul.mubr.bf16.gmra.mrb[0].mxu0 %v1667
        %v1745 = vpop.f32.mrb[0].mxu0
        %v1746 = vadd.f32 %v1641, %v1745
        %v1747 = vpop.f32.mrb[0].mxu0
        %v1748 = vpop.f32.mrb[0].mxu0
        %v1749 = vadd.f32 %v1641, %v1748
        %v1750 = vpop.f32.mrb[0].mxu0
        %1751 = vmatprep.mubr.bf16.mxu0 0
        %1752 = vmatmul.mubr.bf16.gmra.mrb[0].mxu0 %v1669
        %v1753 = vpop.f32.mrb[0].mxu0
        %v1754 = vadd.f32 %v1641, %v1753
        %v1755 = vpop.f32.mrb[0].mxu0
        %v1756 = vpop.f32.mrb[0].mxu0
        %v1757 = vadd.f32 %v1641, %v1756
        %v1758 = vpop.f32.mrb[0].mxu0
        %1759 = vmatprep.mubr.bf16.mxu0 0
        %1760 = vmatmul.mubr.bf16.gmra.mrb[0].mxu0 %v1671
        %v1761 = vpop.f32.mrb[0].mxu0
        %v1762 = vadd.f32 %v1641, %v1761
        %v1763 = vpop.f32.mrb[0].mxu0
        %v1764 = vpop.f32.mrb[0].mxu0
        %v1765 = vadd.f32 %v1641, %v1764
        %v1766 = vpop.f32.mrb[0].mxu0
        %1767 = vmatprep.mubr.bf16.mxu0 0
        %1768 = vmatmul.mubr.bf16.gmra.mrb[0].mxu0 %v1673
        %v1769 = vpop.f32.mrb[0].mxu0
        %v1770 = vadd.f32 %v1641, %v1769
        %v1771 = vpop.f32.mrb[0].mxu0
        %v1772 = vpop.f32.mrb[0].mxu0
        %v1773 = vadd.f32 %v1641, %v1772
        %v1774 = vpop.f32.mrb[0].mxu0
        %1775 = vdwg.mxu0
        %v1776 = vmax.f32 %v1714, 0.0
        %v1777 = vmax.f32 %v1717, 0.0
        %v1778 = vmax.f32 %v1722, 0.0
        %v1779 = vmax.f32 %v1725, 0.0
        %v1780 = vmax.f32 %v1730, 0.0
        %v1781 = vmax.f32 %v1733, 0.0
        %v1782 = vmax.f32 %v1738, 0.0
        %v1783 = vmax.f32 %v1741, 0.0
        %v1784 = vmax.f32 %v1746, 0.0
        %v1785 = vmax.f32 %v1749, 0.0
        %v1786 = vmax.f32 %v1754, 0.0
        %v1787 = vmax.f32 %v1757, 0.0
        %v1788 = vmax.f32 %v1762, 0.0
        %v1789 = vmax.f32 %v1765, 0.0
        %v1790 = vmax.f32 %v1770, 0.0
        %v1791 = vmax.f32 %v1773, 0.0
        %1792 = vst [vmem:[%s187] sm:$0xff] %v1776
        %1793 = vst [vmem:[%s187 + $0x8] sm:$0xff] %v1777
        %1794 = vst [vmem:[%s187 + $0x10] sm:$0xff] %v1778
        %1795 = vst [vmem:[%s187 + $0x18] sm:$0xff] %v1779
        %1796 = vst [vmem:[%s187 + $0x20] sm:$0xff] %v1780
        %1797 = vst [vmem:[%s187 + $0x28] sm:$0xff] %v1781
        %1798 = vst [vmem:[%s187 + $0x30] sm:$0xff] %v1782
        %1799 = vst [vmem:[%s187 + $0x38] sm:$0xff] %v1783
        %1800 = vst [vmem:[%s187 + $0x40] sm:$0xff] %v1784
        %1801 = vst [vmem:[%s187 + $0x48] sm:$0xff] %v1785
        %1802 = vst [vmem:[%s187 + $0x50] sm:$0xff] %v1786
        %1803 = vst [vmem:[%s187 + $0x58] sm:$0xff] %v1787
        %1804 = vst [vmem:[%s187 + $0x60] sm:$0xff] %v1788
        %1805 = vst [vmem:[%s187 + $0x68] sm:$0xff] %v1789
        %1806 = vst [vmem:[%s187 + $0x70] sm:$0xff] %v1790
        %1807 = vst [vmem:[%s187 + $0x78] sm:$0xff] %v1791
        %s1808 = sand.u32 %s109, 1
        %s1809 = scalar_lea.sflag [#allocation3], %s1808
        %s1810 = sand.u32 %s109, 1
        %s1811 = smul.addr %s1810, 128
        %s1812 = scalar_lea.vmem [#allocation2], %s1811
        // Predicated region
        $region33: #{tpu_custom_call.1} parent=31 // pred_check
          %p1813 = pneg %p119
        $region34: #{tpu_custom_call.1} parent=31 // pred_check_branch
          %1815 = sbr.rel (%p1813) target = $region36
        $region35: #{tpu_custom_call.1} parent=31 // pred_region
          %s1816 = smul.u32 8, %s22
          %s1818 = ssub.s32 2048, 2048
          %1819 = vsyncadd %s1809, %s1818
          %s1820 = smul.addr %s1816, 2
          %s1821 = smul.addr %s21, 32
          %s1822 = sadd.s32 %s1820, %s1821
          %s1823 = smul.addr %s1822, 128
          %s1824 = scalar_lea.hbm %s3, %s1823
          %s1825 = sshll.u32 %s1812, 4
          %s1826 = int_to_ptr.vmem [resolvable:$true] %s1825
          %1831 = dma.vmem_to_hbm [thread:$0]  %s1826, 2048, %s1824, %s1809, 128, 128, 8
        $region36: #{tpu_custom_call.1} parent=31 // pred_fallthru
          _
      $region32: #{tpu_custom_call.1} parent=5 // pred_fallthru
        _
      %p1832 = scmp.le.s32.totalorder 2, %s12
      // Predicated region
      $region37: #{tpu_custom_call.1} parent=5 // pred_check
        %p1833 = pneg %p1832
      $region38: #{tpu_custom_call.1} parent=5 // pred_check_branch
        %1835 = sbr.rel (%p1833) target = $region40
      $region39: #{tpu_custom_call.1} parent=5 // pred_region
        %s1836 = ssub.s32 %s12, 2
        // Predicated region
        $region41: #{tpu_custom_call.1} parent=39 // pred_check
          %p1837 = pneg %p125
        $region42: #{tpu_custom_call.1} parent=39 // pred_check_branch
          %1839 = sbr.rel (%p1837) target = $region44
        $region43: #{tpu_custom_call.1} parent=39 // pred_region
          %s1840 = sand.u32 %s110, 1
          %s1841 = scalar_lea.sflag [#allocation3], %s1840
          %s1842 = sand.u32 %s110, 1
          %s1843 = smul.addr %s1842, 128
          %s1844 = scalar_lea.vmem [#allocation2], %s1843
          %1845 = dma.done %s1841, 2048
        $region44: #{tpu_custom_call.1} parent=39 // pred_fallthru
          _
      $region40: #{tpu_custom_call.1} parent=5 // pred_fallthru
        _
    $region6: #{tpu_custom_call.1} parent=1 // loop_footer
      %s16 = sadd.s32 1, %s12
    $region7: #{tpu_custom_call.1} parent=1 // loop_footer_branch
      %11 = sbr.rel target = $region3
    $region8: #{tpu_custom_call.1} parent=1 // loop_exit
      _
    %1846 = vsyncpa [#allocation3], 1
    %s1847 = scalar_lea.sflag [#allocation3], 1
    %1848 = vsyncpa %s1847, 1

</llo_original>
